<compile_context>
chip_gen: v7x
topology: tpu7x:2x2x1
jax: 0.10.0
libtpu: 0.0.40
codegen_flags: <defaults>
</compile_context>

<pallas_src>
import jax
import jax.numpy as jnp
from jax.experimental import pallas as pl
from jax.experimental.pallas import tpu as pltpu

LANE = 128  # vreg lane width; hidden/embedding feature dims are padded to this.


def _round_up(n, m):
    return ((n + m - 1) // m) * m


# ---------------------------------------------------------------------------
# Kernel
# ---------------------------------------------------------------------------
def ref_pm_share_kernel(
    zid_ref,                    # (TB, 1)   int32  attribute ids
    x_ref,                      # (TB, dim_x) f32  (unpadded lanes)
    emb_ref,                    # (NAP, DXP) bf16  padded embedding table
    w1_ref, w2_ref, b12_ref,    # (DXP, DHP) bf16, (dim_x, DHP) bf16, (1, DHP) f32
    w3_ref, b3_ref,
    w4_ref, b4_ref,
    w5_ref, b5_ref,
    w6_ref, b6_ref,             # (DHP, DHP) bf16, (1, DHP) f32
    wac_ref, bac_ref,           # (DHP, 2*DXP) bf16, (1, 2*DXP) f32  (wa | wc)
    y_ref,                      # (TB, dim_x) f32
):
    tb, dim_x = y_ref.shape
    nap, dxp = emb_ref.shape

    x = x_ref[...]                                        # (TB, dim_x) f32
    ids = zid_ref[...]                                    # (TB, 1) int32

    # In-kernel embedding gather: one-hot selection on the MXU (exact, since
    # the one-hot has a single 1.0 per row and the table is already bf16 —
    # identical numerics to gathering in f32 and casting to bf16 afterwards).
    iota = jax.lax.broadcasted_iota(jnp.int32, (tb, nap), 1)
    onehot = (iota == ids).astype(jnp.bfloat16)           # (TB, NAP)
    z_emb = jnp.dot(onehot, emb_ref[...],
                    preferred_element_type=jnp.float32)   # (TB, DXP) f32

    def dot_bf16(act_f32, w_ref):
        # bf16 MXU inputs, f32 accumulation.
        return jnp.dot(act_f32.astype(jnp.bfloat16), w_ref[...],
                       preferred_element_type=jnp.float32)

    # mlp_ac: o = w1(z) + w2(x); biases b1+b2 pre-fused into b12.
    o = dot_bf16(z_emb, w1_ref) + dot_bf16(x, w2_ref) + b12_ref[...]
    o = dot_bf16(jnp.maximum(o, 0.0), w3_ref) + b3_ref[...]
    o = dot_bf16(jnp.maximum(o, 0.0), w4_ref) + b4_ref[...]
    o = dot_bf16(jnp.maximum(o, 0.0), w5_ref) + b5_ref[...]
    o = dot_bf16(jnp.maximum(o, 0.0), w6_ref) + b6_ref[...]
    ac = dot_bf16(jnp.maximum(o, 0.0), wac_ref) + bac_ref[...]   # (TB, 2*DXP)

    # Slice the two heads back to the real dim_x lanes (padded lanes are 0).
    a = ac[:, :dim_x]
    c = ac[:, dxp:dxp + dim_x]

    # Reflection: y = x - 2 * (<x-c, a> / <a, a>) * a   (per row).
    # Note: rows with a == 0 would produce Inf/NaN, same as the PyTorch
    # reference; padded batch rows (if any) are sliced off in the wrapper.
    dot_aa = jnp.sum(a * a, axis=-1, keepdims=True)               # (TB, 1)
    dot_xca = jnp.sum((x - c) * a, axis=-1, keepdims=True)        # (TB, 1)
    r = pl.reciprocal(dot_aa, approx=True)                        # EUP vrcp
    r = r * (2.0 - dot_aa * r)                                    # Newton step
    y_ref[...] = x - 2.0 * (dot_xca * r) * a


# ---------------------------------------------------------------------------
# Parameter preparation (padding / fusing / bf16 casting) -- done once.
# ---------------------------------------------------------------------------
def prepare_kernel_params(params, dim_x, dim_h, n_attributes):
    dxp = _round_up(dim_x, LANE)
    dhp = _round_up(dim_h, LANE)
    nap = _round_up(n_attributes, LANE)   # lane-dense one-hot gather matmul

    def pad2(w, rows, cols):
        return jnp.pad(w, ((0, rows - w.shape[0]), (0, cols - w.shape[1])))

    kp = {"dim_x": dim_x, "dim_h": dim_h, "dxp": dxp, "dhp": dhp, "nap": nap}

    kp["embed"] = pad2(params["embed_z"], nap, dxp).astype(jnp.bfloat16)
    kp["w1"] = pad2(params["w1"], dxp, dhp).astype(jnp.bfloat16)
    kp["w2"] = pad2(params["w2"], dim_x, dhp).astype(jnp.bfloat16)  # K = dim_x (x unpadded)
    kp["b12"] = pad2(params["b1"] + params["b2"], 1, dhp)

    for name in ("w3", "w4", "w5", "w6"):
        bname = "b" + name[1:]
        kp[name] = pad2(params[name], dhp, dhp).astype(jnp.bfloat16)
        kp[bname] = pad2(params[bname], 1, dhp)

    # Fuse the two heads: relu(o) @ [wa | wc]  (padded output columns are 0).
    wa = pad2(params["wa"], dhp, dxp)
    wc = pad2(params["wc"], dhp, dxp)
    kp["wac"] = jnp.concatenate([wa, wc], axis=1).astype(jnp.bfloat16)
    kp["bac"] = jnp.concatenate(
        [pad2(params["ba"], 1, dxp), pad2(params["bc"], 1, dxp)], axis=1)
    return kp


# ---------------------------------------------------------------------------
# Wrapper
# ---------------------------------------------------------------------------
def ref_pm_share_forward(x, z_ids, kp, *, tile_b=None):
    """x: (B, dim_x) float32, z_ids: (B,) int32 attribute ids."""
    B, dim_x = x.shape
    assert dim_x == kp["dim_x"]

    if tile_b is None:
        # Large tiles for HBM streaming efficiency, but keep >= 2 grid steps
        # so the "parallel" axis can shard across v7x's two TensorCores
        # (a 2-step grid costs ~0.35 us on single-TC chips — negligible).
        tile_b = max(8, min(512, _round_up(pl.cdiv(B, 2), 8)))
    tile_b = _round_up(tile_b, 8)
    bp = _round_up(B, tile_b)

    z_ids = z_ids.astype(jnp.int32)
    if bp != B:
        x_in = jnp.pad(x, ((0, bp - B), (0, 0)))
        z_in = jnp.pad(z_ids, (0, bp - B))
    else:
        x_in, z_in = x, z_ids
    z_in = z_in.reshape(bp, 1)

    weights = [kp["embed"],
               kp["w1"], kp["w2"], kp["b12"],
               kp["w3"], kp["b3"], kp["w4"], kp["b4"],
               kp["w5"], kp["b5"], kp["w6"], kp["b6"],
               kp["wac"], kp["bac"]]

    grid = (bp // tile_b,)
    in_specs = [
        pl.BlockSpec((tile_b, 1), lambda i: (i, 0)),        # attribute ids
        pl.BlockSpec((tile_b, dim_x), lambda i: (i, 0)),    # x (unpadded lanes)
    ]
    # Constant index_map -> weights stay VMEM-resident across grid steps.
    in_specs += [pl.BlockSpec(w.shape, lambda i: (0, 0)) for w in weights]
    out_spec = pl.BlockSpec((tile_b, dim_x), lambda i: (i, 0))

    y = pl.pallas_call(
        ref_pm_share_kernel,
        out_shape=jax.ShapeDtypeStruct((bp, dim_x), jnp.float32),
        grid=grid,
        in_specs=in_specs,
        out_specs=out_spec,
        compiler_params=pltpu.CompilerParams(
            dimension_semantics=("parallel",)),             # megacore split on v7x
    )(z_in, x_in, *weights)

    return y if bp == B else y[:B]


# ---------------------------------------------------------------------------
# Parameters / references
# ---------------------------------------------------------------------------
def make_params(key, dim_x, dim_h, n_attributes=4):
    """Deterministic synthetic parameters (shapes match the PyTorch module).

    Linear weights are stored pre-transposed as (in, out); biases as (1, out).
    """
    keys = jax.random.split(key, 18)
    k = iter(keys)

    def lin(in_f, out_f):
        w = jax.random.normal(next(k), (in_f, out_f), jnp.float32) * (1.0 / jnp.sqrt(in_f))
        b = jax.random.normal(next(k), (1, out_f), jnp.float32) * 0.01
        return w, b

    params = {}
    params["embed_z"] = jax.random.normal(next(k), (n_attributes, dim_x), jnp.float32)
    params["w1"], params["b1"] = lin(dim_x, dim_h)
    params["w2"], params["b2"] = lin(dim_x, dim_h)
    params["w3"], params["b3"] = lin(dim_h, dim_h)
    params["w4"], params["b4"] = lin(dim_h, dim_h)
    params["w5"], params["b5"] = lin(dim_h, dim_h)
    params["w6"], params["b6"] = lin(dim_h, dim_h)
    params["wa"], params["ba"] = lin(dim_h, dim_x)
    params["wc"], params["bc"] = lin(dim_h, dim_x)
    return params


def reference_forward_f32(x, z_ids, params):
    """Pure-JAX f32 reference replicating the PyTorch semantics exactly
    (kept for documentation; the kernel uses bf16 MXU inputs)."""
    z = params["embed_z"][z_ids]
    relu = jax.nn.relu
    o = (z @ params["w1"] + params["b1"]) + (x @ params["w2"] + params["b2"])
    o = relu(o) @ params["w3"] + params["b3"]
    o = relu(o) @ params["w4"] + params["b4"]
    o = relu(o) @ params["w5"] + params["b5"]
    o = relu(o) @ params["w6"] + params["b6"]
    a = relu(o) @ params["wa"] + params["ba"]
    c = relu(o) @ params["wc"] + params["bc"]
    dot_aa = jnp.sum(a * a, axis=-1, keepdims=True)
    dot_xca = jnp.sum((x - c) * a, axis=-1, keepdims=True)
    return x - 2.0 * (dot_xca / dot_aa) * a


def reference_forward_bf16(x, z_ids, params):
    """Pure-JAX reference with the same bf16-at-matmul numerics as the kernel."""
    z = params["embed_z"][z_ids]
    relu = jax.nn.relu

    def lin(inp, w, b):
        return jnp.dot(inp.astype(jnp.bfloat16), w.astype(jnp.bfloat16),
                       preferred_element_type=jnp.float32) + b

    o = lin(z, params["w1"], params["b1"]) + lin(x, params["w2"], params["b2"])
    o = lin(relu(o), params["w3"], params["b3"])
    o = lin(relu(o), params["w4"], params["b4"])
    o = lin(relu(o), params["w5"], params["b5"])
    o = lin(relu(o), params["w6"], params["b6"])
    a = lin(relu(o), params["wa"], params["ba"])
    c = lin(relu(o), params["wc"], params["bc"])
    dot_aa = jnp.sum(a * a, axis=-1, keepdims=True)
    dot_xca = jnp.sum((x - c) * a, axis=-1, keepdims=True)
    return x - 2.0 * (dot_xca / dot_aa) * a


# ---------------------------------------------------------------------------
if __name__ == "__main__":
    B, dim_x, dim_h, n_attr = 256, 32, 32, 4

    key = jax.random.PRNGKey(0)
    k_x, k_z, k_p = jax.random.split(key, 3)

    x = jax.random.normal(k_x, (B, dim_x), jnp.float32)
    z_ids = jax.random.randint(k_z, (B,), 0, n_attr, jnp.int32)
    params = make_params(k_p, dim_x, dim_h, n_attr)
    kparams = prepare_kernel_params(params, dim_x, dim_h, n_attr)

    y = ref_pm_share_forward(x, z_ids, kparams)   # default tile_b -> 128, 2 grid steps
    y = jax.block_until_ready(y)

    assert y.shape == (B, dim_x)
    # Check against a reference with matching bf16-at-matmul numerics (the
    # precision choice, not the kernel structure, is what differs from f32).
    y_ref = reference_forward_bf16(x, z_ids, params)
    assert jnp.allclose(y, y_ref, atol=2e-3, rtol=2e-3), \
        "mismatch vs bf16-matched JAX reference"

    print("KERNEL_OK")
</pallas_src>

<mosaic_0001>
module attributes {stable_mosaic.version = 11 : i64} {
  func.func @ref_pm_share_kernel(%arg0: i32, %arg1: memref<128x1xi32, #tpu.memory_space<vmem>>, %arg2: memref<128x32xf32, #tpu.memory_space<vmem>>, %arg3: memref<128x128xbf16, #tpu.memory_space<vmem>>, %arg4: memref<128x128xbf16, #tpu.memory_space<vmem>>, %arg5: memref<32x128xbf16, #tpu.memory_space<vmem>>, %arg6: memref<1x128xf32, #tpu.memory_space<vmem>>, %arg7: memref<128x128xbf16, #tpu.memory_space<vmem>>, %arg8: memref<1x128xf32, #tpu.memory_space<vmem>>, %arg9: memref<128x128xbf16, #tpu.memory_space<vmem>>, %arg10: memref<1x128xf32, #tpu.memory_space<vmem>>, %arg11: memref<128x128xbf16, #tpu.memory_space<vmem>>, %arg12: memref<1x128xf32, #tpu.memory_space<vmem>>, %arg13: memref<128x128xbf16, #tpu.memory_space<vmem>>, %arg14: memref<1x128xf32, #tpu.memory_space<vmem>>, %arg15: memref<128x256xbf16, #tpu.memory_space<vmem>>, %arg16: memref<1x256xf32, #tpu.memory_space<vmem>>, %arg17: memref<128x32xf32, #tpu.memory_space<vmem>>) attributes {dimension_semantics = [#tpu.dimension_semantics<parallel>], iteration_bounds = array<i64: 2>, scalar_prefetch = 0 : i64, scratch_operands = 0 : i64, tpu.core_type = #tpu.core_type<tc>, window_params = [{transform_indices = @transform_0, window_bounds = array<i64: 128, 1>}, {transform_indices = @transform_1, window_bounds = array<i64: 128, 32>}, {pipeline_mode = #tpu.pipeline_mode<synchronous>, transform_indices = @transform_2, window_bounds = array<i64: 128, 128>}, {pipeline_mode = #tpu.pipeline_mode<synchronous>, transform_indices = @transform_3, window_bounds = array<i64: 128, 128>}, {pipeline_mode = #tpu.pipeline_mode<synchronous>, transform_indices = @transform_4, window_bounds = array<i64: 32, 128>}, {pipeline_mode = #tpu.pipeline_mode<synchronous>, transform_indices = @transform_5, window_bounds = array<i64: 1, 128>}, {pipeline_mode = #tpu.pipeline_mode<synchronous>, transform_indices = @transform_6, window_bounds = array<i64: 128, 128>}, {pipeline_mode = #tpu.pipeline_mode<synchronous>, transform_indices = @transform_7, window_bounds = array<i64: 1, 128>}, {pipeline_mode = #tpu.pipeline_mode<synchronous>, transform_indices = @transform_8, window_bounds = array<i64: 128, 128>}, {pipeline_mode = #tpu.pipeline_mode<synchronous>, transform_indices = @transform_9, window_bounds = array<i64: 1, 128>}, {pipeline_mode = #tpu.pipeline_mode<synchronous>, transform_indices = @transform_10, window_bounds = array<i64: 128, 128>}, {pipeline_mode = #tpu.pipeline_mode<synchronous>, transform_indices = @transform_11, window_bounds = array<i64: 1, 128>}, {pipeline_mode = #tpu.pipeline_mode<synchronous>, transform_indices = @transform_12, window_bounds = array<i64: 128, 128>}, {pipeline_mode = #tpu.pipeline_mode<synchronous>, transform_indices = @transform_13, window_bounds = array<i64: 1, 128>}, {pipeline_mode = #tpu.pipeline_mode<synchronous>, transform_indices = @transform_14, window_bounds = array<i64: 128, 256>}, {pipeline_mode = #tpu.pipeline_mode<synchronous>, transform_indices = @transform_15, window_bounds = array<i64: 1, 256>}, {transform_indices = @transform_16, window_bounds = array<i64: 128, 32>}]} {
    %c0 = arith.constant 0 : index
    %c0_0 = arith.constant 0 : index
    %0 = vector.load %arg2[%c0, %c0_0] : memref<128x32xf32, #tpu.memory_space<vmem>>, vector<128x32xf32>
    %c0_1 = arith.constant 0 : index
    %c0_2 = arith.constant 0 : index
    %1 = vector.load %arg1[%c0_1, %c0_2] : memref<128x1xi32, #tpu.memory_space<vmem>>, vector<128x1xi32>
    %2 = tpu.iota {dimensions = array<i32: 1>} : vector<128x128xi32>
    %3 = vector.broadcast %1 : vector<128x1xi32> to vector<128x128xi32>
    %4 = arith.cmpi eq, %2, %3 : vector<128x128xi32>
    %5 = arith.extui %4 : vector<128x128xi1> to vector<128x128xi32>
    %6 = arith.sitofp %5 : vector<128x128xi32> to vector<128x128xf32>
    %7 = arith.truncf %6 : vector<128x128xf32> to vector<128x128xbf16>
    %c0_3 = arith.constant 0 : index
    %c0_4 = arith.constant 0 : index
    %8 = vector.load %arg3[%c0_3, %c0_4] : memref<128x128xbf16, #tpu.memory_space<vmem>>, vector<128x128xbf16>
    %cst = arith.constant dense<0.000000e+00> : vector<128x128xf32>
    %9 = tpu.matmul %7, %8, %cst {dimension_numbers = #tpu.dot_dimension_numbers<[1], [0], [0], [1], [0, 0, 1, 1], [], []>} : vector<128x128xbf16>, vector<128x128xbf16>, vector<128x128xf32> -> vector<128x128xf32>
    %10 = arith.truncf %9 : vector<128x128xf32> to vector<128x128xbf16>
    %c0_5 = arith.constant 0 : index
    %c0_6 = arith.constant 0 : index
    %11 = vector.load %arg4[%c0_5, %c0_6] : memref<128x128xbf16, #tpu.memory_space<vmem>>, vector<128x128xbf16>
    %cst_7 = arith.constant dense<0.000000e+00> : vector<128x128xf32>
    %12 = tpu.matmul %10, %11, %cst_7 {dimension_numbers = #tpu.dot_dimension_numbers<[1], [0], [0], [1], [0, 0, 1, 1], [], []>} : vector<128x128xbf16>, vector<128x128xbf16>, vector<128x128xf32> -> vector<128x128xf32>
    %13 = arith.truncf %0 : vector<128x32xf32> to vector<128x32xbf16>
    %c0_8 = arith.constant 0 : index
    %c0_9 = arith.constant 0 : index
    %14 = vector.load %arg5[%c0_8, %c0_9] : memref<32x128xbf16, #tpu.memory_space<vmem>>, vector<32x128xbf16>
    %cst_10 = arith.constant dense<0.000000e+00> : vector<128x128xf32>
    %15 = tpu.matmul %13, %14, %cst_10 {dimension_numbers = #tpu.dot_dimension_numbers<[1], [0], [0], [1], [0, 0, 1, 1], [], []>} : vector<128x32xbf16>, vector<32x128xbf16>, vector<128x128xf32> -> vector<128x128xf32>
    %16 = arith.addf %12, %15 : vector<128x128xf32>
    %c0_11 = arith.constant 0 : index
    %c0_12 = arith.constant 0 : index
    %17 = vector.load %arg6[%c0_11, %c0_12] : memref<1x128xf32, #tpu.memory_space<vmem>>, vector<1x128xf32>
    %18 = vector.broadcast %17 : vector<1x128xf32> to vector<128x128xf32>
    %19 = arith.addf %16, %18 : vector<128x128xf32>
    %cst_13 = arith.constant 0.000000e+00 : f32
    %20 = vector.broadcast %cst_13 : f32 to vector<128x128xf32>
    %21 = arith.maximumf %19, %20 : vector<128x128xf32>
    %22 = arith.truncf %21 : vector<128x128xf32> to vector<128x128xbf16>
    %c0_14 = arith.constant 0 : index
    %c0_15 = arith.constant 0 : index
    %23 = vector.load %arg7[%c0_14, %c0_15] : memref<128x128xbf16, #tpu.memory_space<vmem>>, vector<128x128xbf16>
    %cst_16 = arith.constant dense<0.000000e+00> : vector<128x128xf32>
    %24 = tpu.matmul %22, %23, %cst_16 {dimension_numbers = #tpu.dot_dimension_numbers<[1], [0], [0], [1], [0, 0, 1, 1], [], []>} : vector<128x128xbf16>, vector<128x128xbf16>, vector<128x128xf32> -> vector<128x128xf32>
    %c0_17 = arith.constant 0 : index
    %c0_18 = arith.constant 0 : index
    %25 = vector.load %arg8[%c0_17, %c0_18] : memref<1x128xf32, #tpu.memory_space<vmem>>, vector<1x128xf32>
    %26 = vector.broadcast %25 : vector<1x128xf32> to vector<128x128xf32>
    %27 = arith.addf %24, %26 : vector<128x128xf32>
    %cst_19 = arith.constant 0.000000e+00 : f32
    %28 = vector.broadcast %cst_19 : f32 to vector<128x128xf32>
    %29 = arith.maximumf %27, %28 : vector<128x128xf32>
    %30 = arith.truncf %29 : vector<128x128xf32> to vector<128x128xbf16>
    %c0_20 = arith.constant 0 : index
    %c0_21 = arith.constant 0 : index
    %31 = vector.load %arg9[%c0_20, %c0_21] : memref<128x128xbf16, #tpu.memory_space<vmem>>, vector<128x128xbf16>
    %cst_22 = arith.constant dense<0.000000e+00> : vector<128x128xf32>
    %32 = tpu.matmul %30, %31, %cst_22 {dimension_numbers = #tpu.dot_dimension_numbers<[1], [0], [0], [1], [0, 0, 1, 1], [], []>} : vector<128x128xbf16>, vector<128x128xbf16>, vector<128x128xf32> -> vector<128x128xf32>
    %c0_23 = arith.constant 0 : index
    %c0_24 = arith.constant 0 : index
    %33 = vector.load %arg10[%c0_23, %c0_24] : memref<1x128xf32, #tpu.memory_space<vmem>>, vector<1x128xf32>
    %34 = vector.broadcast %33 : vector<1x128xf32> to vector<128x128xf32>
    %35 = arith.addf %32, %34 : vector<128x128xf32>
    %cst_25 = arith.constant 0.000000e+00 : f32
    %36 = vector.broadcast %cst_25 : f32 to vector<128x128xf32>
    %37 = arith.maximumf %35, %36 : vector<128x128xf32>
    %38 = arith.truncf %37 : vector<128x128xf32> to vector<128x128xbf16>
    %c0_26 = arith.constant 0 : index
    %c0_27 = arith.constant 0 : index
    %39 = vector.load %arg11[%c0_26, %c0_27] : memref<128x128xbf16, #tpu.memory_space<vmem>>, vector<128x128xbf16>
    %cst_28 = arith.constant dense<0.000000e+00> : vector<128x128xf32>
    %40 = tpu.matmul %38, %39, %cst_28 {dimension_numbers = #tpu.dot_dimension_numbers<[1], [0], [0], [1], [0, 0, 1, 1], [], []>} : vector<128x128xbf16>, vector<128x128xbf16>, vector<128x128xf32> -> vector<128x128xf32>
    %c0_29 = arith.constant 0 : index
    %c0_30 = arith.constant 0 : index
    %41 = vector.load %arg12[%c0_29, %c0_30] : memref<1x128xf32, #tpu.memory_space<vmem>>, vector<1x128xf32>
    %42 = vector.broadcast %41 : vector<1x128xf32> to vector<128x128xf32>
    %43 = arith.addf %40, %42 : vector<128x128xf32>
    %cst_31 = arith.constant 0.000000e+00 : f32
    %44 = vector.broadcast %cst_31 : f32 to vector<128x128xf32>
    %45 = arith.maximumf %43, %44 : vector<128x128xf32>
    %46 = arith.truncf %45 : vector<128x128xf32> to vector<128x128xbf16>
    %c0_32 = arith.constant 0 : index
    %c0_33 = arith.constant 0 : index
    %47 = vector.load %arg13[%c0_32, %c0_33] : memref<128x128xbf16, #tpu.memory_space<vmem>>, vector<128x128xbf16>
    %cst_34 = arith.constant dense<0.000000e+00> : vector<128x128xf32>
    %48 = tpu.matmul %46, %47, %cst_34 {dimension_numbers = #tpu.dot_dimension_numbers<[1], [0], [0], [1], [0, 0, 1, 1], [], []>} : vector<128x128xbf16>, vector<128x128xbf16>, vector<128x128xf32> -> vector<128x128xf32>
    %c0_35 = arith.constant 0 : index
    %c0_36 = arith.constant 0 : index
    %49 = vector.load %arg14[%c0_35, %c0_36] : memref<1x128xf32, #tpu.memory_space<vmem>>, vector<1x128xf32>
    %50 = vector.broadcast %49 : vector<1x128xf32> to vector<128x128xf32>
    %51 = arith.addf %48, %50 : vector<128x128xf32>
    %cst_37 = arith.constant 0.000000e+00 : f32
    %52 = vector.broadcast %cst_37 : f32 to vector<128x128xf32>
    %53 = arith.maximumf %51, %52 : vector<128x128xf32>
    %54 = arith.truncf %53 : vector<128x128xf32> to vector<128x128xbf16>
    %c0_38 = arith.constant 0 : index
    %c0_39 = arith.constant 0 : index
    %55 = vector.load %arg15[%c0_38, %c0_39] : memref<128x256xbf16, #tpu.memory_space<vmem>>, vector<128x256xbf16>
    %cst_40 = arith.constant dense<0.000000e+00> : vector<128x256xf32>
    %56 = tpu.matmul %54, %55, %cst_40 {dimension_numbers = #tpu.dot_dimension_numbers<[1], [0], [0], [1], [0, 0, 1, 1], [], []>} : vector<128x128xbf16>, vector<128x256xbf16>, vector<128x256xf32> -> vector<128x256xf32>
    %c0_41 = arith.constant 0 : index
    %c0_42 = arith.constant 0 : index
    %57 = vector.load %arg16[%c0_41, %c0_42] : memref<1x256xf32, #tpu.memory_space<vmem>>, vector<1x256xf32>
    %58 = vector.broadcast %57 : vector<1x256xf32> to vector<128x256xf32>
    %59 = arith.addf %56, %58 : vector<128x256xf32>
    %60 = vector.extract_strided_slice %59 {offsets = [0, 0], sizes = [128, 32], strides = [1, 1]} : vector<128x256xf32> to vector<128x32xf32>
    %61 = vector.extract_strided_slice %59 {offsets = [0, 128], sizes = [128, 32], strides = [1, 1]} : vector<128x256xf32> to vector<128x32xf32>
    %62 = arith.mulf %60, %60 : vector<128x32xf32>
    %cst_43 = arith.constant dense<0.000000e+00> : vector<128xf32>
    %63 = vector.multi_reduction <add>, %62, %cst_43 [1] : vector<128x32xf32> to vector<128xf32>
    %64 = vector.shape_cast %63 : vector<128xf32> to vector<128x1xf32>
    %65 = arith.subf %0, %61 : vector<128x32xf32>
    %66 = arith.mulf %65, %60 : vector<128x32xf32>
    %cst_44 = arith.constant dense<0.000000e+00> : vector<128xf32>
    %67 = vector.multi_reduction <add>, %66, %cst_44 [1] : vector<128x32xf32> to vector<128xf32>
    %68 = vector.shape_cast %67 : vector<128xf32> to vector<128x1xf32>
    %69 = tpu.reciprocal %64 {approx = true} : vector<128x1xf32> -> vector<128x1xf32>
    %70 = arith.mulf %64, %69 : vector<128x1xf32>
    %cst_45 = arith.constant 2.000000e+00 : f32
    %71 = vector.broadcast %cst_45 : f32 to vector<128x1xf32>
    %72 = arith.subf %71, %70 : vector<128x1xf32>
    %73 = arith.mulf %69, %72 : vector<128x1xf32>
    %74 = arith.mulf %68, %73 : vector<128x1xf32>
    %cst_46 = arith.constant 2.000000e+00 : f32
    %75 = vector.broadcast %cst_46 : f32 to vector<128x1xf32>
    %76 = arith.mulf %75, %74 : vector<128x1xf32>
    %77 = vector.broadcast %76 : vector<128x1xf32> to vector<128x32xf32>
    %78 = arith.mulf %77, %60 : vector<128x32xf32>
    %79 = arith.subf %0, %78 : vector<128x32xf32>
    %c0_47 = arith.constant 0 : index
    %c0_48 = arith.constant 0 : index
    %80 = vector.load %arg17[%c0_47, %c0_48] : memref<128x32xf32, #tpu.memory_space<vmem>>, vector<128x32xf32>
    tpu.vector_store %arg17[%c0_47, %c0_48], %79 {strides = array<i32>} : memref<128x32xf32, #tpu.memory_space<vmem>>, vector<128x32xf32>,
    return
  }
  func.func @transform_0(%arg0: i32) -> (i32, i32) {
    %c0_i32 = arith.constant 0 : i32
    %c0_i32_0 = arith.constant 0 : i32
    return %arg0, %c0_i32 : i32, i32
  }
  func.func @transform_1(%arg0: i32) -> (i32, i32) {
    %c0_i32 = arith.constant 0 : i32
    %c0_i32_0 = arith.constant 0 : i32
    return %arg0, %c0_i32 : i32, i32
  }
  func.func @transform_2(%arg0: i32) -> (i32, i32) {
    %c0_i32 = arith.constant 0 : i32
    %c0_i32_0 = arith.constant 0 : i32
    %c0_i32_1 = arith.constant 0 : i32
    return %c0_i32, %c0_i32_0 : i32, i32
  }
  func.func @transform_3(%arg0: i32) -> (i32, i32) {
    %c0_i32 = arith.constant 0 : i32
    %c0_i32_0 = arith.constant 0 : i32
    %c0_i32_1 = arith.constant 0 : i32
    return %c0_i32, %c0_i32_0 : i32, i32
  }
  func.func @transform_4(%arg0: i32) -> (i32, i32) {
    %c0_i32 = arith.constant 0 : i32
    %c0_i32_0 = arith.constant 0 : i32
    %c0_i32_1 = arith.constant 0 : i32
    return %c0_i32, %c0_i32_0 : i32, i32
  }
  func.func @transform_5(%arg0: i32) -> (i32, i32) {
    %c0_i32 = arith.constant 0 : i32
    %c0_i32_0 = arith.constant 0 : i32
    %c0_i32_1 = arith.constant 0 : i32
    return %c0_i32, %c0_i32_0 : i32, i32
  }
  func.func @transform_6(%arg0: i32) -> (i32, i32) {
    %c0_i32 = arith.constant 0 : i32
    %c0_i32_0 = arith.constant 0 : i32
    %c0_i32_1 = arith.constant 0 : i32
    return %c0_i32, %c0_i32_0 : i32, i32
  }
  func.func @transform_7(%arg0: i32) -> (i32, i32) {
    %c0_i32 = arith.constant 0 : i32
    %c0_i32_0 = arith.constant 0 : i32
    %c0_i32_1 = arith.constant 0 : i32
    return %c0_i32, %c0_i32_0 : i32, i32
  }
  func.func @transform_8(%arg0: i32) -> (i32, i32) {
    %c0_i32 = arith.constant 0 : i32
    %c0_i32_0 = arith.constant 0 : i32
    %c0_i32_1 = arith.constant 0 : i32
    return %c0_i32, %c0_i32_0 : i32, i32
  }
  func.func @transform_9(%arg0: i32) -> (i32, i32) {
    %c0_i32 = arith.constant 0 : i32
    %c0_i32_0 = arith.constant 0 : i32
    %c0_i32_1 = arith.constant 0 : i32
    return %c0_i32, %c0_i32_0 : i32, i32
  }
  func.func @transform_10(%arg0: i32) -> (i32, i32) {
    %c0_i32 = arith.constant 0 : i32
    %c0_i32_0 = arith.constant 0 : i32
    %c0_i32_1 = arith.constant 0 : i32
    return %c0_i32, %c0_i32_0 : i32, i32
  }
  func.func @transform_11(%arg0: i32) -> (i32, i32) {
    %c0_i32 = arith.constant 0 : i32
    %c0_i32_0 = arith.constant 0 : i32
    %c0_i32_1 = arith.constant 0 : i32
    return %c0_i32, %c0_i32_0 : i32, i32
  }
  func.func @transform_12(%arg0: i32) -> (i32, i32) {
    %c0_i32 = arith.constant 0 : i32
    %c0_i32_0 = arith.constant 0 : i32
    %c0_i32_1 = arith.constant 0 : i32
    return %c0_i32, %c0_i32_0 : i32, i32
  }
  func.func @transform_13(%arg0: i32) -> (i32, i32) {
    %c0_i32 = arith.constant 0 : i32
    %c0_i32_0 = arith.constant 0 : i32
    %c0_i32_1 = arith.constant 0 : i32
    return %c0_i32, %c0_i32_0 : i32, i32
  }
  func.func @transform_14(%arg0: i32) -> (i32, i32) {
    %c0_i32 = arith.constant 0 : i32
    %c0_i32_0 = arith.constant 0 : i32
    %c0_i32_1 = arith.constant 0 : i32
    return %c0_i32, %c0_i32_0 : i32, i32
  }
  func.func @transform_15(%arg0: i32) -> (i32, i32) {
    %c0_i32 = arith.constant 0 : i32
    %c0_i32_0 = arith.constant 0 : i32
    %c0_i32_1 = arith.constant 0 : i32
    return %c0_i32, %c0_i32_0 : i32, i32
  }
  func.func @transform_16(%arg0: i32) -> (i32, i32) {
    %c0_i32 = arith.constant 0 : i32
    %c0_i32_0 = arith.constant 0 : i32
    return %arg0, %c0_i32 : i32, i32
  }
}

</mosaic_0001>

<llo_original>
// kernel: tpu_custom_call.1
$region0: #{tpu_custom_call.1}
  #allocation0 [shape = 'u32[]', space=smem, size = 0x4, offset = 0x4, fixed_abs, tag = 'smem constant byte address 0x4 - core index']
  #allocation1 [shape = 'u32[144,128]{1,0:T(1,128)}', space=vmem, size = 0x12000, scoped, tag = 'internal scratch']
  %s0 = inlined_call_operand.vmem [shape: s32[256,1], index: 0, kind: input, shape index: {}]
  %s1 = inlined_call_operand.vmem [shape: f32[256,32], index: 1, kind: input, shape index: {}]
  %s2 = inlined_call_operand.vmem [shape: bf16[128,128], index: 2, kind: input, shape index: {}]
  %s3 = inlined_call_operand.vmem [shape: bf16[128,128], index: 3, kind: input, shape index: {}]
  %s4 = inlined_call_operand.vmem [shape: bf16[32,128], index: 4, kind: input, shape index: {}]
  %s5 = inlined_call_operand.vmem [shape: f32[1,128], index: 5, kind: input, shape index: {}]
  %s6 = inlined_call_operand.vmem [shape: bf16[128,128], index: 6, kind: input, shape index: {}]
  %s7 = inlined_call_operand.vmem [shape: f32[1,128], index: 7, kind: input, shape index: {}]
  %s8 = inlined_call_operand.vmem [shape: bf16[128,128], index: 8, kind: input, shape index: {}]
  %s9 = inlined_call_operand.vmem [shape: f32[1,128], index: 9, kind: input, shape index: {}]
  %s10 = inlined_call_operand.vmem [shape: bf16[128,128], index: 10, kind: input, shape index: {}]
  %s11 = inlined_call_operand.vmem [shape: f32[1,128], index: 11, kind: input, shape index: {}]
  %s12 = inlined_call_operand.vmem [shape: bf16[128,128], index: 12, kind: input, shape index: {}]
  %s13 = inlined_call_operand.vmem [shape: f32[1,128], index: 13, kind: input, shape index: {}]
  %s14 = inlined_call_operand.vmem [shape: bf16[128,256], index: 14, kind: input, shape index: {}]
  %s15 = inlined_call_operand.vmem [shape: f32[1,256], index: 15, kind: input, shape index: {}]
  %s16 = inlined_call_operand.vmem [shape: f32[256,32], index: 16, kind: output, shape index: {}]
  %s17 = sld [smem:[#allocation0]]
  $region97: #{tpu_custom_call.1} parent=0
    _
  %s19 = ssub.s32 1, %s17
  %s20 = scalar_select 0, %s19, %s17
  loop: start=0, step=1, limit=4
  $region2: #{tpu_custom_call.1} parent=0 // loop_pre_header
    _
  $region3: #{tpu_custom_call.1} parent=0 // loop_header
    %s22 = sphi 0, %s26
    %p23 = scmp.ge.s32.totalorder %s22, 4
    %s32 = sphi 0, %s34
    %s35 = sphi 0, %s32
    %s36 = sphi 0, %s35
    %s52 = sphi 0, %s36
    %s58 = sphi 0, %s60
    %s61 = sphi 0, %s58
    %s62 = sphi 0, %s61
    %s78 = sphi 0, %s62
    %s82 = sphi 0, %s82
    %s84 = sphi 0, %s82
    %s85 = sphi 0, %s84
    %s99 = sphi 0, %s85
    %s103 = sphi 0, %s103
    %s105 = sphi 0, %s103
    %s106 = sphi 0, %s105
    %s120 = sphi 0, %s106
    %s124 = sphi 0, %s124
    %s126 = sphi 0, %s124
    %s127 = sphi 0, %s126
    %s141 = sphi 0, %s127
    %s145 = sphi 0, %s145
    %s147 = sphi 0, %s145
    %s148 = sphi 0, %s147
    %s162 = sphi 0, %s148
    %s166 = sphi 0, %s166
    %s168 = sphi 0, %s166
    %s169 = sphi 0, %s168
    %s183 = sphi 0, %s169
    %s187 = sphi 0, %s187
    %s189 = sphi 0, %s187
    %s190 = sphi 0, %s189
    %s204 = sphi 0, %s190
    %s208 = sphi 0, %s208
    %s210 = sphi 0, %s208
    %s211 = sphi 0, %s210
    %s225 = sphi 0, %s211
    %s229 = sphi 0, %s229
    %s231 = sphi 0, %s229
    %s232 = sphi 0, %s231
    %s246 = sphi 0, %s232
    %s250 = sphi 0, %s250
    %s252 = sphi 0, %s250
    %s253 = sphi 0, %s252
    %s267 = sphi 0, %s253
    %s271 = sphi 0, %s271
    %s273 = sphi 0, %s271
    %s274 = sphi 0, %s273
    %s288 = sphi 0, %s274
    %s292 = sphi 0, %s292
    %s294 = sphi 0, %s292
    %s295 = sphi 0, %s294
    %s309 = sphi 0, %s295
    %s313 = sphi 0, %s313
    %s315 = sphi 0, %s313
    %s316 = sphi 0, %s315
    %s330 = sphi 0, %s316
    %s334 = sphi 0, %s334
    %s336 = sphi 0, %s334
    %s337 = sphi 0, %s336
    %s351 = sphi 0, %s337
    %s355 = sphi 0, %s355
    %s357 = sphi 0, %s355
    %s358 = sphi 0, %s357
    %s372 = sphi 0, %s358
    %s378 = sphi 0, %s380
    %s381 = sphi 0, %s378
    %s382 = sphi 0, %s381
    %s398 = sphi 0, %s382
  $region4: #{tpu_custom_call.1} parent=0 // loop_header_branch
    %25 = sbr.rel (%p23) target = $region8
  $region5: #{tpu_custom_call.1} parent=0 // loop_body
    %s27 = ssub.s32 %s22, 1
    %s28 = ssub.s32 %s22, 2
    %s29 = sadd.s32 %s22, 1
    %s30 = ssub.s32 %s22, %s29
    %p31 = scmp.eq.s32.totalorder %s30, 0
    %s33 = sadd.s32 %s32, 1
    %s34 = scalar_select %p31, %s32, %s33
    %p37 = pneg %p31
    %p38 = scmp.eq.s32.totalorder %s22, 1
    %p39 = por %p37, %p38
    %p40 = scmp.ne.s32.totalorder %s32, %s35
    %p41 = scmp.eq.s32.totalorder %s22, 0
    %p42 = por %p40, %p41
    %p43 = scmp.ne.s32.totalorder %s32, %s35
    %p44 = scmp.eq.s32.totalorder %s27, 1
    %p45 = por %p43, %p44
    %p46 = scmp.ne.s32.totalorder %s35, %s36
    %p47 = scmp.eq.s32.totalorder %s27, 0
    %p48 = por %p46, %p47
    %p49 = scmp.ne.s32.totalorder %s35, %s36
    %p50 = scmp.eq.s32.totalorder %s28, 1
    %p51 = por %p49, %p50
    %p53 = scmp.ne.s32.totalorder %s36, %s52
    %p54 = scmp.eq.s32.totalorder %s28, 0
    %p55 = por %p53, %p54
    %s56 = ssub.s32 %s22, %s29
    %p57 = scmp.eq.s32.totalorder %s56, 0
    %s59 = sadd.s32 %s58, 1
    %s60 = scalar_select %p57, %s58, %s59
    %p63 = pneg %p57
    %p64 = scmp.eq.s32.totalorder %s22, 1
    %p65 = por %p63, %p64
    %p66 = scmp.ne.s32.totalorder %s58, %s61
    %p67 = scmp.eq.s32.totalorder %s22, 0
    %p68 = por %p66, %p67
    %p69 = scmp.ne.s32.totalorder %s58, %s61
    %p70 = scmp.eq.s32.totalorder %s27, 1
    %p71 = por %p69, %p70
    %p72 = scmp.ne.s32.totalorder %s61, %s62
    %p73 = scmp.eq.s32.totalorder %s27, 0
    %p74 = por %p72, %p73
    %p75 = scmp.ne.s32.totalorder %s61, %s62
    %p76 = scmp.eq.s32.totalorder %s28, 1
    %p77 = por %p75, %p76
    %p79 = scmp.ne.s32.totalorder %s62, %s78
    %p80 = scmp.eq.s32.totalorder %s28, 0
    %p81 = por %p79, %p80
    %s83 = sadd.s32 %s82, 1
    %p86 = scmp.eq.s32.totalorder %s22, 1
    %p87 = scmp.ne.s32.totalorder %s82, %s84
    %p88 = scmp.eq.s32.totalorder %s22, 0
    %p89 = por %p87, %p88
    %p90 = scmp.ne.s32.totalorder %s82, %s84
    %p91 = scmp.eq.s32.totalorder %s27, 1
    %p92 = por %p90, %p91
    %p93 = scmp.ne.s32.totalorder %s84, %s85
    %p94 = scmp.eq.s32.totalorder %s27, 0
    %p95 = por %p93, %p94
    %p96 = scmp.ne.s32.totalorder %s84, %s85
    %p97 = scmp.eq.s32.totalorder %s28, 1
    %p98 = por %p96, %p97
    %p100 = scmp.ne.s32.totalorder %s85, %s99
    %p101 = scmp.eq.s32.totalorder %s28, 0
    %p102 = por %p100, %p101
    %s104 = sadd.s32 %s103, 1
    %p107 = scmp.eq.s32.totalorder %s22, 1
    %p108 = scmp.ne.s32.totalorder %s103, %s105
    %p109 = scmp.eq.s32.totalorder %s22, 0
    %p110 = por %p108, %p109
    %p111 = scmp.ne.s32.totalorder %s103, %s105
    %p112 = scmp.eq.s32.totalorder %s27, 1
    %p113 = por %p111, %p112
    %p114 = scmp.ne.s32.totalorder %s105, %s106
    %p115 = scmp.eq.s32.totalorder %s27, 0
    %p116 = por %p114, %p115
    %p117 = scmp.ne.s32.totalorder %s105, %s106
    %p118 = scmp.eq.s32.totalorder %s28, 1
    %p119 = por %p117, %p118
    %p121 = scmp.ne.s32.totalorder %s106, %s120
    %p122 = scmp.eq.s32.totalorder %s28, 0
    %p123 = por %p121, %p122
    %s125 = sadd.s32 %s124, 1
    %p128 = scmp.eq.s32.totalorder %s22, 1
    %p129 = scmp.ne.s32.totalorder %s124, %s126
    %p130 = scmp.eq.s32.totalorder %s22, 0
    %p131 = por %p129, %p130
    %p132 = scmp.ne.s32.totalorder %s124, %s126
    %p133 = scmp.eq.s32.totalorder %s27, 1
    %p134 = por %p132, %p133
    %p135 = scmp.ne.s32.totalorder %s126, %s127
    %p136 = scmp.eq.s32.totalorder %s27, 0
    %p137 = por %p135, %p136
    %p138 = scmp.ne.s32.totalorder %s126, %s127
    %p139 = scmp.eq.s32.totalorder %s28, 1
    %p140 = por %p138, %p139
    %p142 = scmp.ne.s32.totalorder %s127, %s141
    %p143 = scmp.eq.s32.totalorder %s28, 0
    %p144 = por %p142, %p143
    %s146 = sadd.s32 %s145, 1
    %p149 = scmp.eq.s32.totalorder %s22, 1
    %p150 = scmp.ne.s32.totalorder %s145, %s147
    %p151 = scmp.eq.s32.totalorder %s22, 0
    %p152 = por %p150, %p151
    %p153 = scmp.ne.s32.totalorder %s145, %s147
    %p154 = scmp.eq.s32.totalorder %s27, 1
    %p155 = por %p153, %p154
    %p156 = scmp.ne.s32.totalorder %s147, %s148
    %p157 = scmp.eq.s32.totalorder %s27, 0
    %p158 = por %p156, %p157
    %p159 = scmp.ne.s32.totalorder %s147, %s148
    %p160 = scmp.eq.s32.totalorder %s28, 1
    %p161 = por %p159, %p160
    %p163 = scmp.ne.s32.totalorder %s148, %s162
    %p164 = scmp.eq.s32.totalorder %s28, 0
    %p165 = por %p163, %p164
    %s167 = sadd.s32 %s166, 1
    %p170 = scmp.eq.s32.totalorder %s22, 1
    %p171 = scmp.ne.s32.totalorder %s166, %s168
    %p172 = scmp.eq.s32.totalorder %s22, 0
    %p173 = por %p171, %p172
    %p174 = scmp.ne.s32.totalorder %s166, %s168
    %p175 = scmp.eq.s32.totalorder %s27, 1
    %p176 = por %p174, %p175
    %p177 = scmp.ne.s32.totalorder %s168, %s169
    %p178 = scmp.eq.s32.totalorder %s27, 0
    %p179 = por %p177, %p178
    %p180 = scmp.ne.s32.totalorder %s168, %s169
    %p181 = scmp.eq.s32.totalorder %s28, 1
    %p182 = por %p180, %p181
    %p184 = scmp.ne.s32.totalorder %s169, %s183
    %p185 = scmp.eq.s32.totalorder %s28, 0
    %p186 = por %p184, %p185
    %s188 = sadd.s32 %s187, 1
    %p191 = scmp.eq.s32.totalorder %s22, 1
    %p192 = scmp.ne.s32.totalorder %s187, %s189
    %p193 = scmp.eq.s32.totalorder %s22, 0
    %p194 = por %p192, %p193
    %p195 = scmp.ne.s32.totalorder %s187, %s189
    %p196 = scmp.eq.s32.totalorder %s27, 1
    %p197 = por %p195, %p196
    %p198 = scmp.ne.s32.totalorder %s189, %s190
    %p199 = scmp.eq.s32.totalorder %s27, 0
    %p200 = por %p198, %p199
    %p201 = scmp.ne.s32.totalorder %s189, %s190
    %p202 = scmp.eq.s32.totalorder %s28, 1
    %p203 = por %p201, %p202
    %p205 = scmp.ne.s32.totalorder %s190, %s204
    %p206 = scmp.eq.s32.totalorder %s28, 0
    %p207 = por %p205, %p206
    %s209 = sadd.s32 %s208, 1
    %p212 = scmp.eq.s32.totalorder %s22, 1
    %p213 = scmp.ne.s32.totalorder %s208, %s210
    %p214 = scmp.eq.s32.totalorder %s22, 0
    %p215 = por %p213, %p214
    %p216 = scmp.ne.s32.totalorder %s208, %s210
    %p217 = scmp.eq.s32.totalorder %s27, 1
    %p218 = por %p216, %p217
    %p219 = scmp.ne.s32.totalorder %s210, %s211
    %p220 = scmp.eq.s32.totalorder %s27, 0
    %p221 = por %p219, %p220
    %p222 = scmp.ne.s32.totalorder %s210, %s211
    %p223 = scmp.eq.s32.totalorder %s28, 1
    %p224 = por %p222, %p223
    %p226 = scmp.ne.s32.totalorder %s211, %s225
    %p227 = scmp.eq.s32.totalorder %s28, 0
    %p228 = por %p226, %p227
    %s230 = sadd.s32 %s229, 1
    %p233 = scmp.eq.s32.totalorder %s22, 1
    %p234 = scmp.ne.s32.totalorder %s229, %s231
    %p235 = scmp.eq.s32.totalorder %s22, 0
    %p236 = por %p234, %p235
    %p237 = scmp.ne.s32.totalorder %s229, %s231
    %p238 = scmp.eq.s32.totalorder %s27, 1
    %p239 = por %p237, %p238
    %p240 = scmp.ne.s32.totalorder %s231, %s232
    %p241 = scmp.eq.s32.totalorder %s27, 0
    %p242 = por %p240, %p241
    %p243 = scmp.ne.s32.totalorder %s231, %s232
    %p244 = scmp.eq.s32.totalorder %s28, 1
    %p245 = por %p243, %p244
    %p247 = scmp.ne.s32.totalorder %s232, %s246
    %p248 = scmp.eq.s32.totalorder %s28, 0
    %p249 = por %p247, %p248
    %s251 = sadd.s32 %s250, 1
    %p254 = scmp.eq.s32.totalorder %s22, 1
    %p255 = scmp.ne.s32.totalorder %s250, %s252
    %p256 = scmp.eq.s32.totalorder %s22, 0
    %p257 = por %p255, %p256
    %p258 = scmp.ne.s32.totalorder %s250, %s252
    %p259 = scmp.eq.s32.totalorder %s27, 1
    %p260 = por %p258, %p259
    %p261 = scmp.ne.s32.totalorder %s252, %s253
    %p262 = scmp.eq.s32.totalorder %s27, 0
    %p263 = por %p261, %p262
    %p264 = scmp.ne.s32.totalorder %s252, %s253
    %p265 = scmp.eq.s32.totalorder %s28, 1
    %p266 = por %p264, %p265
    %p268 = scmp.ne.s32.totalorder %s253, %s267
    %p269 = scmp.eq.s32.totalorder %s28, 0
    %p270 = por %p268, %p269
    %s272 = sadd.s32 %s271, 1
    %p275 = scmp.eq.s32.totalorder %s22, 1
    %p276 = scmp.ne.s32.totalorder %s271, %s273
    %p277 = scmp.eq.s32.totalorder %s22, 0
    %p278 = por %p276, %p277
    %p279 = scmp.ne.s32.totalorder %s271, %s273
    %p280 = scmp.eq.s32.totalorder %s27, 1
    %p281 = por %p279, %p280
    %p282 = scmp.ne.s32.totalorder %s273, %s274
    %p283 = scmp.eq.s32.totalorder %s27, 0
    %p284 = por %p282, %p283
    %p285 = scmp.ne.s32.totalorder %s273, %s274
    %p286 = scmp.eq.s32.totalorder %s28, 1
    %p287 = por %p285, %p286
    %p289 = scmp.ne.s32.totalorder %s274, %s288
    %p290 = scmp.eq.s32.totalorder %s28, 0
    %p291 = por %p289, %p290
    %s293 = sadd.s32 %s292, 1
    %p296 = scmp.eq.s32.totalorder %s22, 1
    %p297 = scmp.ne.s32.totalorder %s292, %s294
    %p298 = scmp.eq.s32.totalorder %s22, 0
    %p299 = por %p297, %p298
    %p300 = scmp.ne.s32.totalorder %s292, %s294
    %p301 = scmp.eq.s32.totalorder %s27, 1
    %p302 = por %p300, %p301
    %p303 = scmp.ne.s32.totalorder %s294, %s295
    %p304 = scmp.eq.s32.totalorder %s27, 0
    %p305 = por %p303, %p304
    %p306 = scmp.ne.s32.totalorder %s294, %s295
    %p307 = scmp.eq.s32.totalorder %s28, 1
    %p308 = por %p306, %p307
    %p310 = scmp.ne.s32.totalorder %s295, %s309
    %p311 = scmp.eq.s32.totalorder %s28, 0
    %p312 = por %p310, %p311
    %s314 = sadd.s32 %s313, 1
    %p317 = scmp.eq.s32.totalorder %s22, 1
    %p318 = scmp.ne.s32.totalorder %s313, %s315
    %p319 = scmp.eq.s32.totalorder %s22, 0
    %p320 = por %p318, %p319
    %p321 = scmp.ne.s32.totalorder %s313, %s315
    %p322 = scmp.eq.s32.totalorder %s27, 1
    %p323 = por %p321, %p322
    %p324 = scmp.ne.s32.totalorder %s315, %s316
    %p325 = scmp.eq.s32.totalorder %s27, 0
    %p326 = por %p324, %p325
    %p327 = scmp.ne.s32.totalorder %s315, %s316
    %p328 = scmp.eq.s32.totalorder %s28, 1
    %p329 = por %p327, %p328
    %p331 = scmp.ne.s32.totalorder %s316, %s330
    %p332 = scmp.eq.s32.totalorder %s28, 0
    %p333 = por %p331, %p332
    %s335 = sadd.s32 %s334, 1
    %p338 = scmp.eq.s32.totalorder %s22, 1
    %p339 = scmp.ne.s32.totalorder %s334, %s336
    %p340 = scmp.eq.s32.totalorder %s22, 0
    %p341 = por %p339, %p340
    %p342 = scmp.ne.s32.totalorder %s334, %s336
    %p343 = scmp.eq.s32.totalorder %s27, 1
    %p344 = por %p342, %p343
    %p345 = scmp.ne.s32.totalorder %s336, %s337
    %p346 = scmp.eq.s32.totalorder %s27, 0
    %p347 = por %p345, %p346
    %p348 = scmp.ne.s32.totalorder %s336, %s337
    %p349 = scmp.eq.s32.totalorder %s28, 1
    %p350 = por %p348, %p349
    %p352 = scmp.ne.s32.totalorder %s337, %s351
    %p353 = scmp.eq.s32.totalorder %s28, 0
    %p354 = por %p352, %p353
    %s356 = sadd.s32 %s355, 1
    %p359 = scmp.eq.s32.totalorder %s22, 1
    %p360 = scmp.ne.s32.totalorder %s355, %s357
    %p361 = scmp.eq.s32.totalorder %s22, 0
    %p362 = por %p360, %p361
    %p363 = scmp.ne.s32.totalorder %s355, %s357
    %p364 = scmp.eq.s32.totalorder %s27, 1
    %p365 = por %p363, %p364
    %p366 = scmp.ne.s32.totalorder %s357, %s358
    %p367 = scmp.eq.s32.totalorder %s27, 0
    %p368 = por %p366, %p367
    %p369 = scmp.ne.s32.totalorder %s357, %s358
    %p370 = scmp.eq.s32.totalorder %s28, 1
    %p371 = por %p369, %p370
    %p373 = scmp.ne.s32.totalorder %s358, %s372
    %p374 = scmp.eq.s32.totalorder %s28, 0
    %p375 = por %p373, %p374
    %s376 = ssub.s32 %s22, %s29
    %p377 = scmp.eq.s32.totalorder %s376, 0
    %s379 = sadd.s32 %s378, 1
    %s380 = scalar_select %p377, %s378, %s379
    %p383 = pneg %p377
    %p384 = scmp.eq.s32.totalorder %s22, 1
    %p385 = por %p383, %p384
    %p386 = scmp.ne.s32.totalorder %s378, %s381
    %p387 = scmp.eq.s32.totalorder %s22, 0
    %p388 = por %p386, %p387
    %p389 = scmp.ne.s32.totalorder %s378, %s381
    %p390 = scmp.eq.s32.totalorder %s27, 1
    %p391 = por %p389, %p390
    %p392 = scmp.ne.s32.totalorder %s381, %s382
    %p393 = scmp.eq.s32.totalorder %s27, 0
    %p394 = por %p392, %p393
    %p395 = scmp.ne.s32.totalorder %s381, %s382
    %p396 = scmp.eq.s32.totalorder %s28, 1
    %p397 = por %p395, %p396
    %p399 = scmp.ne.s32.totalorder %s382, %s398
    %p400 = scmp.eq.s32.totalorder %s28, 0
    %p401 = por %p399, %p400
    %p402 = scmp.le.s32.totalorder 1, %s22
    %p403 = scmp.lt.s32.totalorder %s22, 3
    %p404 = pnand %p402, %p403
    %p405 = pneg %p404
    // Predicated region
    $region9: #{tpu_custom_call.1} parent=5 // pred_check
      _
    $region10: #{tpu_custom_call.1} parent=5 // pred_check_branch
      %407 = sbr.rel (%p404) target = $region12
    $region11: #{tpu_custom_call.1} parent=5 // pred_region
      %s408 = ssub.s32 %s22, 1
      // Predicated region
      $region13: #{tpu_custom_call.1} parent=11 // pred_check
        %p409 = pneg %p95
      $region14: #{tpu_custom_call.1} parent=11 // pred_check_branch
        %411 = sbr.rel (%p409) target = $region16
      $region15: #{tpu_custom_call.1} parent=11 // pred_region
        _
      $region16: #{tpu_custom_call.1} parent=11 // pred_fallthru
        _
      // Predicated region
      $region17: #{tpu_custom_call.1} parent=11 // pred_check
        %p412 = pneg %p116
      $region18: #{tpu_custom_call.1} parent=11 // pred_check_branch
        %414 = sbr.rel (%p412) target = $region20
      $region19: #{tpu_custom_call.1} parent=11 // pred_region
        _
      $region20: #{tpu_custom_call.1} parent=11 // pred_fallthru
        _
      // Predicated region
      $region21: #{tpu_custom_call.1} parent=11 // pred_check
        %p415 = pneg %p137
      $region22: #{tpu_custom_call.1} parent=11 // pred_check_branch
        %417 = sbr.rel (%p415) target = $region24
      $region23: #{tpu_custom_call.1} parent=11 // pred_region
        _
      $region24: #{tpu_custom_call.1} parent=11 // pred_fallthru
        _
      // Predicated region
      $region25: #{tpu_custom_call.1} parent=11 // pred_check
        %p418 = pneg %p158
      $region26: #{tpu_custom_call.1} parent=11 // pred_check_branch
        %420 = sbr.rel (%p418) target = $region28
      $region27: #{tpu_custom_call.1} parent=11 // pred_region
        _
      $region28: #{tpu_custom_call.1} parent=11 // pred_fallthru
        _
      // Predicated region
      $region29: #{tpu_custom_call.1} parent=11 // pred_check
        %p421 = pneg %p179
      $region30: #{tpu_custom_call.1} parent=11 // pred_check_branch
        %423 = sbr.rel (%p421) target = $region32
      $region31: #{tpu_custom_call.1} parent=11 // pred_region
        _
      $region32: #{tpu_custom_call.1} parent=11 // pred_fallthru
        _
      // Predicated region
      $region33: #{tpu_custom_call.1} parent=11 // pred_check
        %p424 = pneg %p200
      $region34: #{tpu_custom_call.1} parent=11 // pred_check_branch
        %426 = sbr.rel (%p424) target = $region36
      $region35: #{tpu_custom_call.1} parent=11 // pred_region
        _
      $region36: #{tpu_custom_call.1} parent=11 // pred_fallthru
        _
      // Predicated region
      $region37: #{tpu_custom_call.1} parent=11 // pred_check
        %p427 = pneg %p221
      $region38: #{tpu_custom_call.1} parent=11 // pred_check_branch
        %429 = sbr.rel (%p427) target = $region40
      $region39: #{tpu_custom_call.1} parent=11 // pred_region
        _
      $region40: #{tpu_custom_call.1} parent=11 // pred_fallthru
        _
      // Predicated region
      $region41: #{tpu_custom_call.1} parent=11 // pred_check
        %p430 = pneg %p242
      $region42: #{tpu_custom_call.1} parent=11 // pred_check_branch
        %432 = sbr.rel (%p430) target = $region44
      $region43: #{tpu_custom_call.1} parent=11 // pred_region
        _
      $region44: #{tpu_custom_call.1} parent=11 // pred_fallthru
        _
      // Predicated region
      $region45: #{tpu_custom_call.1} parent=11 // pred_check
        %p433 = pneg %p263
      $region46: #{tpu_custom_call.1} parent=11 // pred_check_branch
        %435 = sbr.rel (%p433) target = $region48
      $region47: #{tpu_custom_call.1} parent=11 // pred_region
        _
      $region48: #{tpu_custom_call.1} parent=11 // pred_fallthru
        _
      // Predicated region
      $region49: #{tpu_custom_call.1} parent=11 // pred_check
        %p436 = pneg %p284
      $region50: #{tpu_custom_call.1} parent=11 // pred_check_branch
        %438 = sbr.rel (%p436) target = $region52
      $region51: #{tpu_custom_call.1} parent=11 // pred_region
        _
      $region52: #{tpu_custom_call.1} parent=11 // pred_fallthru
        _
      // Predicated region
      $region53: #{tpu_custom_call.1} parent=11 // pred_check
        %p439 = pneg %p305
      $region54: #{tpu_custom_call.1} parent=11 // pred_check_branch
        %441 = sbr.rel (%p439) target = $region56
      $region55: #{tpu_custom_call.1} parent=11 // pred_region
        _
      $region56: #{tpu_custom_call.1} parent=11 // pred_fallthru
        _
      // Predicated region
      $region57: #{tpu_custom_call.1} parent=11 // pred_check
        %p442 = pneg %p326
      $region58: #{tpu_custom_call.1} parent=11 // pred_check_branch
        %444 = sbr.rel (%p442) target = $region60
      $region59: #{tpu_custom_call.1} parent=11 // pred_region
        _
      $region60: #{tpu_custom_call.1} parent=11 // pred_fallthru
        _
      // Predicated region
      $region61: #{tpu_custom_call.1} parent=11 // pred_check
        %p445 = pneg %p347
      $region62: #{tpu_custom_call.1} parent=11 // pred_check_branch
        %447 = sbr.rel (%p445) target = $region64
      $region63: #{tpu_custom_call.1} parent=11 // pred_region
        _
      $region64: #{tpu_custom_call.1} parent=11 // pred_fallthru
        _
      // Predicated region
      $region65: #{tpu_custom_call.1} parent=11 // pred_check
        %p448 = pneg %p368
      $region66: #{tpu_custom_call.1} parent=11 // pred_check_branch
        %450 = sbr.rel (%p448) target = $region68
      $region67: #{tpu_custom_call.1} parent=11 // pred_region
        _
      $region68: #{tpu_custom_call.1} parent=11 // pred_fallthru
        _
    $region12: #{tpu_custom_call.1} parent=5 // pred_fallthru
      _
    %p451 = scmp.lt.s32.totalorder %s22, 2
    // Predicated region
    $region69: #{tpu_custom_call.1} parent=5 // pred_check
      %p452 = pneg %p451
    $region70: #{tpu_custom_call.1} parent=5 // pred_check_branch
      %454 = sbr.rel (%p452) target = $region72
    $region71: #{tpu_custom_call.1} parent=5 // pred_region
      // Predicated region
      $region73: #{tpu_custom_call.1} parent=71 // pred_check
        %p455 = pneg %p42
      $region74: #{tpu_custom_call.1} parent=71 // pred_check_branch
        %457 = sbr.rel (%p455) target = $region76
      $region75: #{tpu_custom_call.1} parent=71 // pred_region
        %s458 = smul.u32 16, %s22
        %p459 = scmp.lt.s32.totalorder %s458, 31
        %s460 = scalar_select %p459, %s458, 31
        %s461 = smul.addr %s460, 8
        %s462 = scalar_lea.vmem %s0, %s461
        %s463 = smul.u32 16, %s22
      $region76: #{tpu_custom_call.1} parent=71 // pred_fallthru
        _
      // Predicated region
      $region77: #{tpu_custom_call.1} parent=71 // pred_check
        %p464 = pneg %p68
      $region78: #{tpu_custom_call.1} parent=71 // pred_check_branch
        %466 = sbr.rel (%p464) target = $region80
      $region79: #{tpu_custom_call.1} parent=71 // pred_region
        %s467 = smul.u32 16, %s22
        %p468 = scmp.lt.s32.totalorder %s467, 31
        %s469 = scalar_select %p468, %s467, 31
        %s470 = smul.addr %s469, 8
        %s471 = scalar_lea.vmem %s1, %s470
        %s472 = smul.u32 16, %s22
      $region80: #{tpu_custom_call.1} parent=71 // pred_fallthru
        _
    $region72: #{tpu_custom_call.1} parent=5 // pred_fallthru
      _
    %p473 = scmp.le.s32.totalorder 1, %s22
    %p474 = scmp.lt.s32.totalorder %s22, 3
    %p475 = pnand %p473, %p474
    %p476 = pneg %p475
    // Predicated region
    $region81: #{tpu_custom_call.1} parent=5 // pred_check
      _
    $region82: #{tpu_custom_call.1} parent=5 // pred_check_branch
      %478 = sbr.rel (%p475) target = $region84
    $region83: #{tpu_custom_call.1} parent=5 // pred_region
      %s479 = ssub.s32 %s22, 1
      %s480 = smul.u32 16, %s27
      %p481 = scmp.lt.s32.totalorder %s480, 31
      %s482 = scalar_select %p481, %s480, 31
      %s483 = smul.addr %s482, 8
      %s484 = scalar_lea.vmem %s0, %s483
      %p485 = pneg %p48
      %p486 = pneg %p45
      %s487 = smul.u32 16, %s27
      %p488 = scmp.lt.s32.totalorder %s487, 31
      %s489 = scalar_select %p488, %s487, 31
      %s490 = smul.addr %s489, 8
      %s491 = scalar_lea.vmem %s1, %s490
      %p492 = pneg %p74
      %p493 = pneg %p71
      %p494 = pneg %p95
      %p495 = pneg %p92
      %p496 = pneg %p116
      %p497 = pneg %p113
      %p498 = pneg %p137
      %p499 = pneg %p134
      %p500 = pneg %p158
      %p501 = pneg %p155
      %p502 = pneg %p179
      %p503 = pneg %p176
      %p504 = pneg %p200
      %p505 = pneg %p197
      %p506 = pneg %p221
      %p507 = pneg %p218
      %p508 = pneg %p242
      %p509 = pneg %p239
      %p510 = pneg %p263
      %p511 = pneg %p260
      %p512 = pneg %p284
      %p513 = pneg %p281
      %p514 = pneg %p305
      %p515 = pneg %p302
      %p516 = pneg %p326
      %p517 = pneg %p323
      %p518 = pneg %p347
      %p519 = pneg %p344
      %p520 = pneg %p368
      %p521 = pneg %p365
      %p522 = pneg %p394
      %p523 = pneg %p391
      %s524 = smul.u32 16, %s27
      %p525 = scmp.lt.s32.totalorder %s524, 31
      %s526 = scalar_select %p525, %s524, 31
      %s527 = smul.addr %s526, 8
      %s528 = scalar_lea.vmem %s16, %s527
      %s529 = smul.u32 16, %s27
      %p530 = scmp.lt.s32.totalorder %s529, 31
      %s531 = scalar_select %p530, %s529, 31
      %s532 = smul.addr %s531, 8
      %s533 = scalar_lea.vmem %s0, %s532
      %s534 = smul.u32 16, %s27
      %s535 = smul.u32 16, %s27
      %p536 = scmp.lt.s32.totalorder %s535, 31
      %s537 = scalar_select %p536, %s535, 31
      %s538 = smul.addr %s537, 8
      %s539 = scalar_lea.vmem %s1, %s538
      %s540 = smul.u32 16, %s27
      %s541 = smul.u32 16, %s27
      %p542 = scmp.lt.s32.totalorder %s541, 31
      %s543 = scalar_select %p542, %s541, 31
      %s544 = smul.addr %s543, 8
      %s545 = scalar_lea.vmem %s16, %s544
      %s546 = smul.u32 16, %s27
      %v548 = vld [vmem:[%s539] sm:$0xff]
      %v549 = vld [vmem:[%s539 + $0x8] sm:$0xff]
      %v550 = vld [vmem:[%s539 + $0x10] sm:$0xff]
      %v551 = vld [vmem:[%s539 + $0x18] sm:$0xff]
      %v552 = vld [vmem:[%s539 + $0x20] sm:$0xff]
      %v553 = vld [vmem:[%s539 + $0x28] sm:$0xff]
      %v554 = vld [vmem:[%s539 + $0x30] sm:$0xff]
      %v555 = vld [vmem:[%s539 + $0x38] sm:$0xff]
      %v556 = vld [vmem:[%s539 + $0x40] sm:$0xff]
      %v557 = vld [vmem:[%s539 + $0x48] sm:$0xff]
      %v558 = vld [vmem:[%s539 + $0x50] sm:$0xff]
      %v559 = vld [vmem:[%s539 + $0x58] sm:$0xff]
      %v560 = vld [vmem:[%s539 + $0x60] sm:$0xff]
      %v561 = vld [vmem:[%s539 + $0x68] sm:$0xff]
      %v562 = vld [vmem:[%s539 + $0x70] sm:$0xff]
      %v563 = vld [vmem:[%s539 + $0x78] sm:$0xff]
      %v564 = vld [vmem:[%s533] sm:$0xff]
      %v565 = vld [vmem:[%s533 + $0x8] sm:$0xff]
      %v566 = vld [vmem:[%s533 + $0x10] sm:$0xff]
      %v567 = vld [vmem:[%s533 + $0x18] sm:$0xff]
      %v568 = vld [vmem:[%s533 + $0x20] sm:$0xff]
      %v569 = vld [vmem:[%s533 + $0x28] sm:$0xff]
      %v570 = vld [vmem:[%s533 + $0x30] sm:$0xff]
      %v571 = vld [vmem:[%s533 + $0x38] sm:$0xff]
      %v572 = vld [vmem:[%s533 + $0x40] sm:$0xff]
      %v573 = vld [vmem:[%s533 + $0x48] sm:$0xff]
      %v574 = vld [vmem:[%s533 + $0x50] sm:$0xff]
      %v575 = vld [vmem:[%s533 + $0x58] sm:$0xff]
      %v576 = vld [vmem:[%s533 + $0x60] sm:$0xff]
      %v577 = vld [vmem:[%s533 + $0x68] sm:$0xff]
      %v578 = vld [vmem:[%s533 + $0x70] sm:$0xff]
      %v579 = vld [vmem:[%s533 + $0x78] sm:$0xff]
      %v580 = vlaneseq
      %v581 = vand.u32 %v580, 127
      %582 = vset.pattern.permute.xlu0 0
      %583 = vperm.xlu0 %582, %v564
      %v584 = vpop.permute.xlu0 %583
      %585 = vset.pattern.permute.xlu0 0
      %586 = vperm.xlu0 %585, %v565
      %v587 = vpop.permute.xlu0 %586
      %588 = vset.pattern.permute.xlu0 0
      %589 = vperm.xlu0 %588, %v566
      %v590 = vpop.permute.xlu0 %589
      %591 = vset.pattern.permute.xlu0 0
      %592 = vperm.xlu0 %591, %v567
      %v593 = vpop.permute.xlu0 %592
      %594 = vset.pattern.permute.xlu0 0
      %595 = vperm.xlu0 %594, %v568
      %v596 = vpop.permute.xlu0 %595
      %597 = vset.pattern.permute.xlu0 0
      %598 = vperm.xlu0 %597, %v569
      %v599 = vpop.permute.xlu0 %598
      %600 = vset.pattern.permute.xlu0 0
      %601 = vperm.xlu0 %600, %v570
      %v602 = vpop.permute.xlu0 %601
      %603 = vset.pattern.permute.xlu0 0
      %604 = vperm.xlu0 %603, %v571
      %v605 = vpop.permute.xlu0 %604
      %606 = vset.pattern.permute.xlu0 0
      %607 = vperm.xlu0 %606, %v572
      %v608 = vpop.permute.xlu0 %607
      %609 = vset.pattern.permute.xlu0 0
      %610 = vperm.xlu0 %609, %v573
      %v611 = vpop.permute.xlu0 %610
      %612 = vset.pattern.permute.xlu0 0
      %613 = vperm.xlu0 %612, %v574
      %v614 = vpop.permute.xlu0 %613
      %615 = vset.pattern.permute.xlu0 0
      %616 = vperm.xlu0 %615, %v575
      %v617 = vpop.permute.xlu0 %616
      %618 = vset.pattern.permute.xlu0 0
      %619 = vperm.xlu0 %618, %v576
      %v620 = vpop.permute.xlu0 %619
      %621 = vset.pattern.permute.xlu0 0
      %622 = vperm.xlu0 %621, %v577
      %v623 = vpop.permute.xlu0 %622
      %624 = vset.pattern.permute.xlu0 0
      %625 = vperm.xlu0 %624, %v578
      %v626 = vpop.permute.xlu0 %625
      %627 = vset.pattern.permute.xlu0 0
      %628 = vperm.xlu0 %627, %v579
      %v629 = vpop.permute.xlu0 %628
      %vm630 = vcmp.eq.s32.totalorder %v581, %v584
      %vm631 = vcmp.eq.s32.totalorder %v581, %v587
      %vm632 = vcmp.eq.s32.totalorder %v581, %v590
      %vm633 = vcmp.eq.s32.totalorder %v581, %v593
      %vm634 = vcmp.eq.s32.totalorder %v581, %v596
      %vm635 = vcmp.eq.s32.totalorder %v581, %v599
      %vm636 = vcmp.eq.s32.totalorder %v581, %v602
      %vm637 = vcmp.eq.s32.totalorder %v581, %v605
      %vm638 = vcmp.eq.s32.totalorder %v581, %v608
      %vm639 = vcmp.eq.s32.totalorder %v581, %v611
      %vm640 = vcmp.eq.s32.totalorder %v581, %v614
      %vm641 = vcmp.eq.s32.totalorder %v581, %v617
      %vm642 = vcmp.eq.s32.totalorder %v581, %v620
      %vm643 = vcmp.eq.s32.totalorder %v581, %v623
      %vm644 = vcmp.eq.s32.totalorder %v581, %v626
      %vm645 = vcmp.eq.s32.totalorder %v581, %v629
      %v646 = vsel %vm630, 1, 0
      %v647 = vsel %vm631, 1, 0
      %v648 = vsel %vm632, 1, 0
      %v649 = vsel %vm633, 1, 0
      %v650 = vsel %vm634, 1, 0
      %v651 = vsel %vm635, 1, 0
      %v652 = vsel %vm636, 1, 0
      %v653 = vsel %vm637, 1, 0
      %v654 = vsel %vm638, 1, 0
      %v655 = vsel %vm639, 1, 0
      %v656 = vsel %vm640, 1, 0
      %v657 = vsel %vm641, 1, 0
      %v658 = vsel %vm642, 1, 0
      %v659 = vsel %vm643, 1, 0
      %v660 = vsel %vm644, 1, 0
      %v661 = vsel %vm645, 1, 0
      %v662 = vcvt.s32.f32 %v646
      %v663 = vcvt.s32.f32 %v647
      %v664 = vcvt.s32.f32 %v648
      %v665 = vcvt.s32.f32 %v649
      %v666 = vcvt.s32.f32 %v650
      %v667 = vcvt.s32.f32 %v651
      %v668 = vcvt.s32.f32 %v652
      %v669 = vcvt.s32.f32 %v653
      %v670 = vcvt.s32.f32 %v654
      %v671 = vcvt.s32.f32 %v655
      %v672 = vcvt.s32.f32 %v656
      %v673 = vcvt.s32.f32 %v657
      %v674 = vcvt.s32.f32 %v658
      %v675 = vcvt.s32.f32 %v659
      %v676 = vcvt.s32.f32 %v660
      %v677 = vcvt.s32.f32 %v661
      %v678 = vpack.c.bf16 %v663, %v662
      %v679 = vpack.c.bf16 %v665, %v664
      %v680 = vpack.c.bf16 %v667, %v666
      %v681 = vpack.c.bf16 %v669, %v668
      %v682 = vpack.c.bf16 %v671, %v670
      %v683 = vpack.c.bf16 %v673, %v672
      %v684 = vpack.c.bf16 %v675, %v674
      %v685 = vpack.c.bf16 %v677, %v676
      %v686 = vld [vmem:[%s2] sm:$0xf]
      %v687 = vld [vmem:[%s2 + $0x4] sm:$0xf]
      %v688 = vld [vmem:[%s2 + $0x8] sm:$0xf]
      %v689 = vld [vmem:[%s2 + $0xc] sm:$0xf]
      %v690 = vld [vmem:[%s2 + $0x10] sm:$0xf]
      %v691 = vld [vmem:[%s2 + $0x14] sm:$0xf]
      %v692 = vld [vmem:[%s2 + $0x18] sm:$0xf]
      %v693 = vld [vmem:[%s2 + $0x1c] sm:$0xf]
      %v694 = vld [vmem:[%s2 + $0x20] sm:$0xf]
      %v695 = vld [vmem:[%s2 + $0x24] sm:$0xf]
      %v696 = vld [vmem:[%s2 + $0x28] sm:$0xf]
      %v697 = vld [vmem:[%s2 + $0x2c] sm:$0xf]
      %v698 = vld [vmem:[%s2 + $0x30] sm:$0xf]
      %v699 = vld [vmem:[%s2 + $0x34] sm:$0xf]
      %v700 = vld [vmem:[%s2 + $0x38] sm:$0xf]
      %v701 = vld [vmem:[%s2 + $0x3c] sm:$0xf]
      %v718 = vunpack.c.l.b16 %v686
      %v719 = vunpack.c.l.b16 %v687
      %v720 = vunpack.c.l.b16 %v688
      %v721 = vunpack.c.l.b16 %v689
      %v722 = vunpack.c.l.b16 %v690
      %v723 = vunpack.c.l.b16 %v691
      %v724 = vunpack.c.l.b16 %v692
      %v725 = vunpack.c.l.b16 %v693
      %v726 = vunpack.c.l.b16 %v694
      %v727 = vunpack.c.l.b16 %v695
      %v728 = vunpack.c.l.b16 %v696
      %v729 = vunpack.c.l.b16 %v697
      %v730 = vunpack.c.l.b16 %v698
      %v731 = vunpack.c.l.b16 %v699
      %v732 = vunpack.c.l.b16 %v700
      %v733 = vunpack.c.l.b16 %v701
      %v734 = vpack.c.b16 %v719, %v718
      %v735 = vpack.c.b16 %v721, %v720
      %v736 = vpack.c.b16 %v723, %v722
      %v737 = vpack.c.b16 %v725, %v724
      %v738 = vpack.c.b16 %v727, %v726
      %v739 = vpack.c.b16 %v729, %v728
      %v740 = vpack.c.b16 %v731, %v730
      %v741 = vpack.c.b16 %v733, %v732
      %750 = vmatprep.subr.bf16.mxu0 0
      %751 = vmatpush1.bf16.msra.mxu0 %v734
      %752 = vmatprep.subr.bf16.mxu0 0
      %753 = vmatpush1.bf16.msra.mxu0 %v735
      %754 = vmatprep.subr.bf16.mxu0 0
      %755 = vmatpush1.bf16.msra.mxu0 %v736
      %756 = vmatprep.subr.bf16.mxu0 0
      %757 = vmatpush1.bf16.msra.mxu0 %v737
      %758 = vmatprep.subr.bf16.mxu0 0
      %759 = vmatpush1.bf16.msra.mxu0 %v738
      %760 = vmatprep.subr.bf16.mxu0 0
      %761 = vmatpush1.bf16.msra.mxu0 %v739
      %762 = vmatprep.subr.bf16.mxu0 0
      %763 = vmatpush1.bf16.msra.mxu0 %v740
      %764 = vmatprep.subr.bf16.mxu0 0
      %765 = vmatpush1.bf16.msra.mxu0 %v741
      %766 = vmatprep.subr.bf16.mxu0 0
      %767 = vmatpush1.bf16.msra.mxu0 0
      %768 = vmatprep.subr.bf16.mxu0 0
      %769 = vmatpush1.bf16.msra.mxu0 0
      %770 = vmatprep.subr.bf16.mxu0 0
      %771 = vmatpush1.bf16.msra.mxu0 0
      %772 = vmatprep.subr.bf16.mxu0 0
      %773 = vmatpush1.bf16.msra.mxu0 0
      %774 = vmatprep.subr.bf16.mxu0 0
      %775 = vmatpush1.bf16.msra.mxu0 0
      %776 = vmatprep.subr.bf16.mxu0 0
      %777 = vmatpush1.bf16.msra.mxu0 0
      %778 = vmatprep.subr.bf16.mxu0 0
      %779 = vmatpush1.bf16.msra.mxu0 0
      %780 = vmatprep.subr.bf16.mxu0 0
      %781 = vmatpush1.bf16.msra.mxu0 0
      %782 = vmatprep.mubr.bf16.mxu0 0
      %783 = vmatmul.mubr.bf16.gmra.mrb[0].mxu0 %v678
      %v784 = vpop.f32.mrb[0].mxu0
      %v785 = vadd.f32 0.0, %v784
      %v786 = vpop.f32.mrb[0].mxu0
      %v787 = vpop.f32.mrb[0].mxu0
      %v788 = vadd.f32 0.0, %v787
      %v789 = vpop.f32.mrb[0].mxu0
      %790 = vmatprep.mubr.bf16.mxu0 0
      %791 = vmatmul.mubr.bf16.gmra.mrb[0].mxu0 %v679
      %v792 = vpop.f32.mrb[0].mxu0
      %v793 = vadd.f32 0.0, %v792
      %v794 = vpop.f32.mrb[0].mxu0
      %v795 = vpop.f32.mrb[0].mxu0
      %v796 = vadd.f32 0.0, %v795
      %v797 = vpop.f32.mrb[0].mxu0
      %798 = vmatprep.mubr.bf16.mxu0 0
      %799 = vmatmul.mubr.bf16.gmra.mrb[0].mxu0 %v680
      %v800 = vpop.f32.mrb[0].mxu0
      %v801 = vadd.f32 0.0, %v800
      %v802 = vpop.f32.mrb[0].mxu0
      %v803 = vpop.f32.mrb[0].mxu0
      %v804 = vadd.f32 0.0, %v803
      %v805 = vpop.f32.mrb[0].mxu0
      %806 = vmatprep.mubr.bf16.mxu0 0
      %807 = vmatmul.mubr.bf16.gmra.mrb[0].mxu0 %v681
      %v808 = vpop.f32.mrb[0].mxu0
      %v809 = vadd.f32 0.0, %v808
      %v810 = vpop.f32.mrb[0].mxu0
      %v811 = vpop.f32.mrb[0].mxu0
      %v812 = vadd.f32 0.0, %v811
      %v813 = vpop.f32.mrb[0].mxu0
      %814 = vmatprep.mubr.bf16.mxu0 0
      %815 = vmatmul.mubr.bf16.gmra.mrb[0].mxu0 %v682
      %v816 = vpop.f32.mrb[0].mxu0
      %v817 = vadd.f32 0.0, %v816
      %v818 = vpop.f32.mrb[0].mxu0
      %v819 = vpop.f32.mrb[0].mxu0
      %v820 = vadd.f32 0.0, %v819
      %v821 = vpop.f32.mrb[0].mxu0
      %822 = vmatprep.mubr.bf16.mxu0 0
      %823 = vmatmul.mubr.bf16.gmra.mrb[0].mxu0 %v683
      %v824 = vpop.f32.mrb[0].mxu0
      %v825 = vadd.f32 0.0, %v824
      %v826 = vpop.f32.mrb[0].mxu0
      %v827 = vpop.f32.mrb[0].mxu0
      %v828 = vadd.f32 0.0, %v827
      %v829 = vpop.f32.mrb[0].mxu0
      %830 = vmatprep.mubr.bf16.mxu0 0
      %831 = vmatmul.mubr.bf16.gmra.mrb[0].mxu0 %v684
      %v832 = vpop.f32.mrb[0].mxu0
      %v833 = vadd.f32 0.0, %v832
      %v834 = vpop.f32.mrb[0].mxu0
      %v835 = vpop.f32.mrb[0].mxu0
      %v836 = vadd.f32 0.0, %v835
      %v837 = vpop.f32.mrb[0].mxu0
      %838 = vmatprep.mubr.bf16.mxu0 0
      %839 = vmatmul.mubr.bf16.gmra.mrb[0].mxu0 %v685
      %v840 = vpop.f32.mrb[0].mxu0
      %v841 = vadd.f32 0.0, %v840
      %v842 = vpop.f32.mrb[0].mxu0
      %v843 = vpop.f32.mrb[0].mxu0
      %v844 = vadd.f32 0.0, %v843
      %v845 = vpop.f32.mrb[0].mxu0
      %846 = vdwg.mxu0
      %v847 = vpack.c.bf16 %v788, %v785
      %v848 = vpack.c.bf16 %v796, %v793
      %v849 = vpack.c.bf16 %v804, %v801
      %v850 = vpack.c.bf16 %v812, %v809
      %v851 = vpack.c.bf16 %v820, %v817
      %v852 = vpack.c.bf16 %v828, %v825
      %v853 = vpack.c.bf16 %v836, %v833
      %v854 = vpack.c.bf16 %v844, %v841
      %v855 = vld [vmem:[%s3] sm:$0xf]
      %v856 = vld [vmem:[%s3 + $0x4] sm:$0xf]
      %v857 = vld [vmem:[%s3 + $0x8] sm:$0xf]
      %v858 = vld [vmem:[%s3 + $0xc] sm:$0xf]
      %v859 = vld [vmem:[%s3 + $0x10] sm:$0xf]
      %v860 = vld [vmem:[%s3 + $0x14] sm:$0xf]
      %v861 = vld [vmem:[%s3 + $0x18] sm:$0xf]
      %v862 = vld [vmem:[%s3 + $0x1c] sm:$0xf]
      %v863 = vld [vmem:[%s3 + $0x20] sm:$0xf]
      %v864 = vld [vmem:[%s3 + $0x24] sm:$0xf]
      %v865 = vld [vmem:[%s3 + $0x28] sm:$0xf]
      %v866 = vld [vmem:[%s3 + $0x2c] sm:$0xf]
      %v867 = vld [vmem:[%s3 + $0x30] sm:$0xf]
      %v868 = vld [vmem:[%s3 + $0x34] sm:$0xf]
      %v869 = vld [vmem:[%s3 + $0x38] sm:$0xf]
      %v870 = vld [vmem:[%s3 + $0x3c] sm:$0xf]
      %v871 = vpack.c.bf16 %v549, %v548
      %v872 = vpack.c.bf16 %v551, %v550
      %v873 = vpack.c.bf16 %v553, %v552
      %v874 = vpack.c.bf16 %v555, %v554
      %v875 = vpack.c.bf16 %v557, %v556
      %v876 = vpack.c.bf16 %v559, %v558
      %v877 = vpack.c.bf16 %v561, %v560
      %v878 = vpack.c.bf16 %v563, %v562
      %v879 = vld [vmem:[%s4] sm:$0xf]
      %v880 = vld [vmem:[%s4 + $0x4] sm:$0xf]
      %v881 = vld [vmem:[%s4 + $0x8] sm:$0xf]
      %v882 = vld [vmem:[%s4 + $0xc] sm:$0xf]
      %v887 = vunpack.c.l.b16 %v879
      %v888 = vunpack.c.l.b16 %v880
      %v889 = vunpack.c.l.b16 %v881
      %v890 = vunpack.c.l.b16 %v882
      %v891 = vpack.c.b16 %v888, %v887
      %v892 = vpack.c.b16 %v890, %v889
      %vm895 = vcmask 261120
      %v897 = vsel %vm895, %v871, 0
      %v900 = vsel %vm895, %v872, 0
      %v903 = vsel %vm895, %v873, 0
      %v906 = vsel %vm895, %v874, 0
      %v909 = vsel %vm895, %v875, 0
      %v912 = vsel %vm895, %v876, 0
      %v915 = vsel %vm895, %v877, 0
      %v918 = vsel %vm895, %v878, 0
      %920 = vmatprep.subr.bf16.mxu0 0
      %921 = vmatpush1.bf16.msra.mxu0 %v891
      %922 = vmatprep.subr.bf16.mxu0 0
      %923 = vmatpush1.bf16.msra.mxu0 %v892
      %924 = vmatprep.subr.bf16.mxu0 0
      %925 = vmatpush1.bf16.msra.mxu0 0
      %926 = vmatprep.subr.bf16.mxu0 0
      %927 = vmatpush1.bf16.msra.mxu0 0
      %928 = vmatprep.subr.bf16.mxu0 0
      %929 = vmatpush1.bf16.msra.mxu0 0
      %930 = vmatprep.subr.bf16.mxu0 0
      %931 = vmatpush1.bf16.msra.mxu0 0
      %932 = vmatprep.subr.bf16.mxu0 0
      %933 = vmatpush1.bf16.msra.mxu0 0
      %934 = vmatprep.subr.bf16.mxu0 0
      %935 = vmatpush1.bf16.msra.mxu0 0
      %936 = vmatprep.subr.bf16.mxu0 0
      %937 = vmatpush1.bf16.msra.mxu0 0
      %938 = vmatprep.subr.bf16.mxu0 0
      %939 = vmatpush1.bf16.msra.mxu0 0
      %940 = vmatprep.subr.bf16.mxu0 0
      %941 = vmatpush1.bf16.msra.mxu0 0
      %942 = vmatprep.subr.bf16.mxu0 0
      %943 = vmatpush1.bf16.msra.mxu0 0
      %944 = vmatprep.subr.bf16.mxu0 0
      %945 = vmatpush1.bf16.msra.mxu0 0
      %946 = vmatprep.subr.bf16.mxu0 0
      %947 = vmatpush1.bf16.msra.mxu0 0
      %948 = vmatprep.subr.bf16.mxu0 0
      %949 = vmatpush1.bf16.msra.mxu0 0
      %950 = vmatprep.subr.bf16.mxu0 0
      %951 = vmatpush1.bf16.msra.mxu0 0
      %952 = vmatprep.mubr.bf16.mxu0 0
      %953 = vmatmul.mubr.bf16.gmra.mrb[0].mxu0 %v897
      %v954 = vpop.f32.mrb[0].mxu0
      %v955 = vadd.f32 0.0, %v954
      %v956 = vpop.f32.mrb[0].mxu0
      %v957 = vpop.f32.mrb[0].mxu0
      %v958 = vadd.f32 0.0, %v957
      %v959 = vpop.f32.mrb[0].mxu0
      %960 = vmatprep.mubr.bf16.mxu0 0
      %961 = vmatmul.mubr.bf16.gmra.mrb[0].mxu0 %v900
      %v962 = vpop.f32.mrb[0].mxu0
      %v963 = vadd.f32 0.0, %v962
      %v964 = vpop.f32.mrb[0].mxu0
      %v965 = vpop.f32.mrb[0].mxu0
      %v966 = vadd.f32 0.0, %v965
      %v967 = vpop.f32.mrb[0].mxu0
      %968 = vmatprep.mubr.bf16.mxu0 0
      %969 = vmatmul.mubr.bf16.gmra.mrb[0].mxu0 %v903
      %v970 = vpop.f32.mrb[0].mxu0
      %v971 = vadd.f32 0.0, %v970
      %v972 = vpop.f32.mrb[0].mxu0
      %v973 = vpop.f32.mrb[0].mxu0
      %v974 = vadd.f32 0.0, %v973
      %v975 = vpop.f32.mrb[0].mxu0
      %976 = vmatprep.mubr.bf16.mxu0 0
      %977 = vmatmul.mubr.bf16.gmra.mrb[0].mxu0 %v906
      %v978 = vpop.f32.mrb[0].mxu0
      %v979 = vadd.f32 0.0, %v978
      %v980 = vpop.f32.mrb[0].mxu0
      %v981 = vpop.f32.mrb[0].mxu0
      %v982 = vadd.f32 0.0, %v981
      %v983 = vpop.f32.mrb[0].mxu0
      %984 = vmatprep.mubr.bf16.mxu0 0
      %985 = vmatmul.mubr.bf16.gmra.mrb[0].mxu0 %v909
      %v986 = vpop.f32.mrb[0].mxu0
      %v987 = vadd.f32 0.0, %v986
      %v988 = vpop.f32.mrb[0].mxu0
      %v989 = vpop.f32.mrb[0].mxu0
      %v990 = vadd.f32 0.0, %v989
      %v991 = vpop.f32.mrb[0].mxu0
      %992 = vmatprep.mubr.bf16.mxu0 0
      %993 = vmatmul.mubr.bf16.gmra.mrb[0].mxu0 %v912
      %v994 = vpop.f32.mrb[0].mxu0
      %v995 = vadd.f32 0.0, %v994
      %v996 = vpop.f32.mrb[0].mxu0
      %v997 = vpop.f32.mrb[0].mxu0
      %v998 = vadd.f32 0.0, %v997
      %v999 = vpop.f32.mrb[0].mxu0
      %1000 = vmatprep.mubr.bf16.mxu0 0
      %1001 = vmatmul.mubr.bf16.gmra.mrb[0].mxu0 %v915
      %v1002 = vpop.f32.mrb[0].mxu0
      %v1003 = vadd.f32 0.0, %v1002
      %v1004 = vpop.f32.mrb[0].mxu0
      %v1005 = vpop.f32.mrb[0].mxu0
      %v1006 = vadd.f32 0.0, %v1005
      %v1007 = vpop.f32.mrb[0].mxu0
      %1008 = vmatprep.mubr.bf16.mxu0 0
      %1009 = vmatmul.mubr.bf16.gmra.mrb[0].mxu0 %v918
      %v1010 = vpop.f32.mrb[0].mxu0
      %v1011 = vadd.f32 0.0, %v1010
      %v1012 = vpop.f32.mrb[0].mxu0
      %v1013 = vpop.f32.mrb[0].mxu0
      %v1014 = vadd.f32 0.0, %v1013
      %v1015 = vpop.f32.mrb[0].mxu0
      %1016 = vdwg.mxu0
      %v1033 = vunpack.c.l.b16 %v855
      %v1034 = vunpack.c.l.b16 %v856
      %v1035 = vunpack.c.l.b16 %v857
      %v1036 = vunpack.c.l.b16 %v858
      %v1037 = vunpack.c.l.b16 %v859
      %v1038 = vunpack.c.l.b16 %v860
      %v1039 = vunpack.c.l.b16 %v861
      %v1040 = vunpack.c.l.b16 %v862
      %v1041 = vunpack.c.l.b16 %v863
      %v1042 = vunpack.c.l.b16 %v864
      %v1043 = vunpack.c.l.b16 %v865
      %v1044 = vunpack.c.l.b16 %v866
      %v1045 = vunpack.c.l.b16 %v867
      %v1046 = vunpack.c.l.b16 %v868
      %v1047 = vunpack.c.l.b16 %v869
      %v1048 = vunpack.c.l.b16 %v870
      %v1049 = vpack.c.b16 %v1034, %v1033
      %v1050 = vpack.c.b16 %v1036, %v1035
      %v1051 = vpack.c.b16 %v1038, %v1037
      %v1052 = vpack.c.b16 %v1040, %v1039
      %v1053 = vpack.c.b16 %v1042, %v1041
      %v1054 = vpack.c.b16 %v1044, %v1043
      %v1055 = vpack.c.b16 %v1046, %v1045
      %v1056 = vpack.c.b16 %v1048, %v1047
      %1065 = vmatprep.subr.bf16.mxu0 0
      %1066 = vmatpush1.bf16.msra.mxu0 %v1049
      %1067 = vmatprep.subr.bf16.mxu0 0
      %1068 = vmatpush1.bf16.msra.mxu0 %v1050
      %1069 = vmatprep.subr.bf16.mxu0 0
      %1070 = vmatpush1.bf16.msra.mxu0 %v1051
      %1071 = vmatprep.subr.bf16.mxu0 0
      %1072 = vmatpush1.bf16.msra.mxu0 %v1052
      %1073 = vmatprep.subr.bf16.mxu0 0
      %1074 = vmatpush1.bf16.msra.mxu0 %v1053
      %1075 = vmatprep.subr.bf16.mxu0 0
      %1076 = vmatpush1.bf16.msra.mxu0 %v1054
      %1077 = vmatprep.subr.bf16.mxu0 0
      %1078 = vmatpush1.bf16.msra.mxu0 %v1055
      %1079 = vmatprep.subr.bf16.mxu0 0
      %1080 = vmatpush1.bf16.msra.mxu0 %v1056
      %1081 = vmatprep.subr.bf16.mxu0 0
      %1082 = vmatpush1.bf16.msra.mxu0 0
      %1083 = vmatprep.subr.bf16.mxu0 0
      %1084 = vmatpush1.bf16.msra.mxu0 0
      %1085 = vmatprep.subr.bf16.mxu0 0
      %1086 = vmatpush1.bf16.msra.mxu0 0
      %1087 = vmatprep.subr.bf16.mxu0 0
      %1088 = vmatpush1.bf16.msra.mxu0 0
      %1089 = vmatprep.subr.bf16.mxu0 0
      %1090 = vmatpush1.bf16.msra.mxu0 0
      %1091 = vmatprep.subr.bf16.mxu0 0
      %1092 = vmatpush1.bf16.msra.mxu0 0
      %1093 = vmatprep.subr.bf16.mxu0 0
      %1094 = vmatpush1.bf16.msra.mxu0 0
      %1095 = vmatprep.subr.bf16.mxu0 0
      %1096 = vmatpush1.bf16.msra.mxu0 0
      %1097 = vmatprep.mubr.bf16.mxu0 0
      %1098 = vmatmul.mubr.bf16.gmra.mrb[0].mxu0 %v847
      %v1099 = vpop.f32.mrb[0].mxu0
      %v1100 = vadd.f32 %v955, %v1099
      %v1101 = vpop.f32.mrb[0].mxu0
      %v1102 = vpop.f32.mrb[0].mxu0
      %v1103 = vadd.f32 %v958, %v1102
      %v1104 = vpop.f32.mrb[0].mxu0
      %1105 = vmatprep.mubr.bf16.mxu0 0
      %1106 = vmatmul.mubr.bf16.gmra.mrb[0].mxu0 %v848
      %v1107 = vpop.f32.mrb[0].mxu0
      %v1108 = vadd.f32 %v963, %v1107
      %v1109 = vpop.f32.mrb[0].mxu0
      %v1110 = vpop.f32.mrb[0].mxu0
      %v1111 = vadd.f32 %v966, %v1110
      %v1112 = vpop.f32.mrb[0].mxu0
      %1113 = vmatprep.mubr.bf16.mxu0 0
      %1114 = vmatmul.mubr.bf16.gmra.mrb[0].mxu0 %v849
      %v1115 = vpop.f32.mrb[0].mxu0
      %v1116 = vadd.f32 %v971, %v1115
      %v1117 = vpop.f32.mrb[0].mxu0
      %v1118 = vpop.f32.mrb[0].mxu0
      %v1119 = vadd.f32 %v974, %v1118
      %v1120 = vpop.f32.mrb[0].mxu0
      %1121 = vmatprep.mubr.bf16.mxu0 0
      %1122 = vmatmul.mubr.bf16.gmra.mrb[0].mxu0 %v850
      %v1123 = vpop.f32.mrb[0].mxu0
      %v1124 = vadd.f32 %v979, %v1123
      %v1125 = vpop.f32.mrb[0].mxu0
      %v1126 = vpop.f32.mrb[0].mxu0
      %v1127 = vadd.f32 %v982, %v1126
      %v1128 = vpop.f32.mrb[0].mxu0
      %1129 = vmatprep.mubr.bf16.mxu0 0
      %1130 = vmatmul.mubr.bf16.gmra.mrb[0].mxu0 %v851
      %v1131 = vpop.f32.mrb[0].mxu0
      %v1132 = vadd.f32 %v987, %v1131
      %v1133 = vpop.f32.mrb[0].mxu0
      %v1134 = vpop.f32.mrb[0].mxu0
      %v1135 = vadd.f32 %v990, %v1134
      %v1136 = vpop.f32.mrb[0].mxu0
      %1137 = vmatprep.mubr.bf16.mxu0 0
      %1138 = vmatmul.mubr.bf16.gmra.mrb[0].mxu0 %v852
      %v1139 = vpop.f32.mrb[0].mxu0
      %v1140 = vadd.f32 %v995, %v1139
      %v1141 = vpop.f32.mrb[0].mxu0
      %v1142 = vpop.f32.mrb[0].mxu0
      %v1143 = vadd.f32 %v998, %v1142
      %v1144 = vpop.f32.mrb[0].mxu0
      %1145 = vmatprep.mubr.bf16.mxu0 0
      %1146 = vmatmul.mubr.bf16.gmra.mrb[0].mxu0 %v853
      %v1147 = vpop.f32.mrb[0].mxu0
      %v1148 = vadd.f32 %v1003, %v1147
      %v1149 = vpop.f32.mrb[0].mxu0
      %v1150 = vpop.f32.mrb[0].mxu0
      %v1151 = vadd.f32 %v1006, %v1150
      %v1152 = vpop.f32.mrb[0].mxu0
      %1153 = vmatprep.mubr.bf16.mxu0 0
      %1154 = vmatmul.mubr.bf16.gmra.mrb[0].mxu0 %v854
      %v1155 = vpop.f32.mrb[0].mxu0
      %v1156 = vadd.f32 %v1011, %v1155
      %v1157 = vpop.f32.mrb[0].mxu0
      %v1158 = vpop.f32.mrb[0].mxu0
      %v1159 = vadd.f32 %v1014, %v1158
      %v1160 = vpop.f32.mrb[0].mxu0
      %1161 = vdwg.mxu0
      %v1162 = vld [vmem:[%s5] sm:$0x1]
      %v1164 = vlaneseq
      %v1165 = vshrl.u32 %v1164, 7
      %v1166 = vsub.s32 0, %v1165
      %v1167 = vrot.slane %v1162, %v1166
      %v1169 = vadd.f32 %v1100, %v1167
      %v1170 = vadd.f32 %v1103, %v1167
      %v1171 = vadd.f32 %v1108, %v1167
      %v1172 = vadd.f32 %v1111, %v1167
      %v1173 = vadd.f32 %v1116, %v1167
      %v1174 = vadd.f32 %v1119, %v1167
      %v1175 = vadd.f32 %v1124, %v1167
      %v1176 = vadd.f32 %v1127, %v1167
      %v1177 = vadd.f32 %v1132, %v1167
      %v1178 = vadd.f32 %v1135, %v1167
      %v1179 = vadd.f32 %v1140, %v1167
      %v1180 = vadd.f32 %v1143, %v1167
      %v1181 = vadd.f32 %v1148, %v1167
      %v1182 = vadd.f32 %v1151, %v1167
      %v1183 = vadd.f32 %v1156, %v1167
      %v1184 = vadd.f32 %v1159, %v1167
      %v1185 = vmax.f32 %v1169, 0.0
      %v1186 = vmax.f32 %v1170, 0.0
      %v1187 = vmax.f32 %v1171, 0.0
      %v1188 = vmax.f32 %v1172, 0.0
      %v1189 = vmax.f32 %v1173, 0.0
      %v1190 = vmax.f32 %v1174, 0.0
      %v1191 = vmax.f32 %v1175, 0.0
      %v1192 = vmax.f32 %v1176, 0.0
      %v1193 = vmax.f32 %v1177, 0.0
      %v1194 = vmax.f32 %v1178, 0.0
      %v1195 = vmax.f32 %v1179, 0.0
      %v1196 = vmax.f32 %v1180, 0.0
      %v1197 = vmax.f32 %v1181, 0.0
      %v1198 = vmax.f32 %v1182, 0.0
      %v1199 = vmax.f32 %v1183, 0.0
      %v1200 = vmax.f32 %v1184, 0.0
      %v1201 = vpack.c.bf16 %v1186, %v1185
      %v1202 = vpack.c.bf16 %v1188, %v1187
      %v1203 = vpack.c.bf16 %v1190, %v1189
      %v1204 = vpack.c.bf16 %v1192, %v1191
      %v1205 = vpack.c.bf16 %v1194, %v1193
      %v1206 = vpack.c.bf16 %v1196, %v1195
      %v1207 = vpack.c.bf16 %v1198, %v1197
      %v1208 = vpack.c.bf16 %v1200, %v1199
      %v1209 = vld [vmem:[%s6] sm:$0xf]
      %v1210 = vld [vmem:[%s6 + $0x4] sm:$0xf]
      %v1211 = vld [vmem:[%s6 + $0x8] sm:$0xf]
      %v1212 = vld [vmem:[%s6 + $0xc] sm:$0xf]
      %v1213 = vld [vmem:[%s6 + $0x10] sm:$0xf]
      %v1214 = vld [vmem:[%s6 + $0x14] sm:$0xf]
      %v1215 = vld [vmem:[%s6 + $0x18] sm:$0xf]
      %v1216 = vld [vmem:[%s6 + $0x1c] sm:$0xf]
      %v1217 = vld [vmem:[%s6 + $0x20] sm:$0xf]
      %v1218 = vld [vmem:[%s6 + $0x24] sm:$0xf]
      %v1219 = vld [vmem:[%s6 + $0x28] sm:$0xf]
      %v1220 = vld [vmem:[%s6 + $0x2c] sm:$0xf]
      %v1221 = vld [vmem:[%s6 + $0x30] sm:$0xf]
      %v1222 = vld [vmem:[%s6 + $0x34] sm:$0xf]
      %v1223 = vld [vmem:[%s6 + $0x38] sm:$0xf]
      %v1224 = vld [vmem:[%s6 + $0x3c] sm:$0xf]
      %v1225 = vld [vmem:[%s7] sm:$0x1]
      %v1227 = vlaneseq
      %v1228 = vshrl.u32 %v1227, 7
      %v1229 = vsub.s32 0, %v1228
      %v1230 = vrot.slane %v1225, %v1229
      %v1248 = vunpack.c.l.b16 %v1209
      %v1249 = vunpack.c.l.b16 %v1210
      %v1250 = vunpack.c.l.b16 %v1211
      %v1251 = vunpack.c.l.b16 %v1212
      %v1252 = vunpack.c.l.b16 %v1213
      %v1253 = vunpack.c.l.b16 %v1214
      %v1254 = vunpack.c.l.b16 %v1215
      %v1255 = vunpack.c.l.b16 %v1216
      %v1256 = vunpack.c.l.b16 %v1217
      %v1257 = vunpack.c.l.b16 %v1218
      %v1258 = vunpack.c.l.b16 %v1219
      %v1259 = vunpack.c.l.b16 %v1220
      %v1260 = vunpack.c.l.b16 %v1221
      %v1261 = vunpack.c.l.b16 %v1222
      %v1262 = vunpack.c.l.b16 %v1223
      %v1263 = vunpack.c.l.b16 %v1224
      %v1264 = vpack.c.b16 %v1249, %v1248
      %v1265 = vpack.c.b16 %v1251, %v1250
      %v1266 = vpack.c.b16 %v1253, %v1252
      %v1267 = vpack.c.b16 %v1255, %v1254
      %v1268 = vpack.c.b16 %v1257, %v1256
      %v1269 = vpack.c.b16 %v1259, %v1258
      %v1270 = vpack.c.b16 %v1261, %v1260
      %v1271 = vpack.c.b16 %v1263, %v1262
      %1280 = vmatprep.subr.bf16.mxu0 0
      %1281 = vmatpush1.bf16.msra.mxu0 %v1264
      %1282 = vmatprep.subr.bf16.mxu0 0
      %1283 = vmatpush1.bf16.msra.mxu0 %v1265
      %1284 = vmatprep.subr.bf16.mxu0 0
      %1285 = vmatpush1.bf16.msra.mxu0 %v1266
      %1286 = vmatprep.subr.bf16.mxu0 0
      %1287 = vmatpush1.bf16.msra.mxu0 %v1267
      %1288 = vmatprep.subr.bf16.mxu0 0
      %1289 = vmatpush1.bf16.msra.mxu0 %v1268
      %1290 = vmatprep.subr.bf16.mxu0 0
      %1291 = vmatpush1.bf16.msra.mxu0 %v1269
      %1292 = vmatprep.subr.bf16.mxu0 0
      %1293 = vmatpush1.bf16.msra.mxu0 %v1270
      %1294 = vmatprep.subr.bf16.mxu0 0
      %1295 = vmatpush1.bf16.msra.mxu0 %v1271
      %1296 = vmatprep.subr.bf16.mxu0 0
      %1297 = vmatpush1.bf16.msra.mxu0 0
      %1298 = vmatprep.subr.bf16.mxu0 0
      %1299 = vmatpush1.bf16.msra.mxu0 0
      %1300 = vmatprep.subr.bf16.mxu0 0
      %1301 = vmatpush1.bf16.msra.mxu0 0
      %1302 = vmatprep.subr.bf16.mxu0 0
      %1303 = vmatpush1.bf16.msra.mxu0 0
      %1304 = vmatprep.subr.bf16.mxu0 0
      %1305 = vmatpush1.bf16.msra.mxu0 0
      %1306 = vmatprep.subr.bf16.mxu0 0
      %1307 = vmatpush1.bf16.msra.mxu0 0
      %1308 = vmatprep.subr.bf16.mxu0 0
      %1309 = vmatpush1.bf16.msra.mxu0 0
      %1310 = vmatprep.subr.bf16.mxu0 0
      %1311 = vmatpush1.bf16.msra.mxu0 0
      %1312 = vmatprep.mubr.bf16.mxu0 0
      %1313 = vmatmul.mubr.bf16.gmra.mrb[0].mxu0 %v1201
      %v1314 = vpop.f32.mrb[0].mxu0
      %v1315 = vadd.f32 %v1230, %v1314
      %v1316 = vpop.f32.mrb[0].mxu0
      %v1317 = vpop.f32.mrb[0].mxu0
      %v1318 = vadd.f32 %v1230, %v1317
      %v1319 = vpop.f32.mrb[0].mxu0
      %1320 = vmatprep.mubr.bf16.mxu0 0
      %1321 = vmatmul.mubr.bf16.gmra.mrb[0].mxu0 %v1202
      %v1322 = vpop.f32.mrb[0].mxu0
      %v1323 = vadd.f32 %v1230, %v1322
      %v1324 = vpop.f32.mrb[0].mxu0
      %v1325 = vpop.f32.mrb[0].mxu0
      %v1326 = vadd.f32 %v1230, %v1325
      %v1327 = vpop.f32.mrb[0].mxu0
      %1328 = vmatprep.mubr.bf16.mxu0 0
      %1329 = vmatmul.mubr.bf16.gmra.mrb[0].mxu0 %v1203
      %v1330 = vpop.f32.mrb[0].mxu0
      %v1331 = vadd.f32 %v1230, %v1330
      %v1332 = vpop.f32.mrb[0].mxu0
      %v1333 = vpop.f32.mrb[0].mxu0
      %v1334 = vadd.f32 %v1230, %v1333
      %v1335 = vpop.f32.mrb[0].mxu0
      %1336 = vmatprep.mubr.bf16.mxu0 0
      %1337 = vmatmul.mubr.bf16.gmra.mrb[0].mxu0 %v1204
      %v1338 = vpop.f32.mrb[0].mxu0
      %v1339 = vadd.f32 %v1230, %v1338
      %v1340 = vpop.f32.mrb[0].mxu0
      %v1341 = vpop.f32.mrb[0].mxu0
      %v1342 = vadd.f32 %v1230, %v1341
      %v1343 = vpop.f32.mrb[0].mxu0
      %1344 = vmatprep.mubr.bf16.mxu0 0
      %1345 = vmatmul.mubr.bf16.gmra.mrb[0].mxu0 %v1205
      %v1346 = vpop.f32.mrb[0].mxu0
      %v1347 = vadd.f32 %v1230, %v1346
      %v1348 = vpop.f32.mrb[0].mxu0
      %v1349 = vpop.f32.mrb[0].mxu0
      %v1350 = vadd.f32 %v1230, %v1349
      %v1351 = vpop.f32.mrb[0].mxu0
      %1352 = vmatprep.mubr.bf16.mxu0 0
      %1353 = vmatmul.mubr.bf16.gmra.mrb[0].mxu0 %v1206
      %v1354 = vpop.f32.mrb[0].mxu0
      %v1355 = vadd.f32 %v1230, %v1354
      %v1356 = vpop.f32.mrb[0].mxu0
      %v1357 = vpop.f32.mrb[0].mxu0
      %v1358 = vadd.f32 %v1230, %v1357
      %v1359 = vpop.f32.mrb[0].mxu0
      %1360 = vmatprep.mubr.bf16.mxu0 0
      %1361 = vmatmul.mubr.bf16.gmra.mrb[0].mxu0 %v1207
      %v1362 = vpop.f32.mrb[0].mxu0
      %v1363 = vadd.f32 %v1230, %v1362
      %v1364 = vpop.f32.mrb[0].mxu0
      %v1365 = vpop.f32.mrb[0].mxu0
      %v1366 = vadd.f32 %v1230, %v1365
      %v1367 = vpop.f32.mrb[0].mxu0
      %1368 = vmatprep.mubr.bf16.mxu0 0
      %1369 = vmatmul.mubr.bf16.gmra.mrb[0].mxu0 %v1208
      %v1370 = vpop.f32.mrb[0].mxu0
      %v1371 = vadd.f32 %v1230, %v1370
      %v1372 = vpop.f32.mrb[0].mxu0
      %v1373 = vpop.f32.mrb[0].mxu0
      %v1374 = vadd.f32 %v1230, %v1373
      %v1375 = vpop.f32.mrb[0].mxu0
      %1376 = vdwg.mxu0
      %v1377 = vmax.f32 %v1315, 0.0
      %v1378 = vmax.f32 %v1318, 0.0
      %v1379 = vmax.f32 %v1323, 0.0
      %v1380 = vmax.f32 %v1326, 0.0
      %v1381 = vmax.f32 %v1331, 0.0
      %v1382 = vmax.f32 %v1334, 0.0
      %v1383 = vmax.f32 %v1339, 0.0
      %v1384 = vmax.f32 %v1342, 0.0
      %v1385 = vmax.f32 %v1347, 0.0
      %v1386 = vmax.f32 %v1350, 0.0
      %v1387 = vmax.f32 %v1355, 0.0
      %v1388 = vmax.f32 %v1358, 0.0
      %v1389 = vmax.f32 %v1363, 0.0
      %v1390 = vmax.f32 %v1366, 0.0
      %v1391 = vmax.f32 %v1371, 0.0
      %v1392 = vmax.f32 %v1374, 0.0
      %v1393 = vpack.c.bf16 %v1378, %v1377
      %v1394 = vpack.c.bf16 %v1380, %v1379
      %v1395 = vpack.c.bf16 %v1382, %v1381
      %v1396 = vpack.c.bf16 %v1384, %v1383
      %v1397 = vpack.c.bf16 %v1386, %v1385
      %v1398 = vpack.c.bf16 %v1388, %v1387
      %v1399 = vpack.c.bf16 %v1390, %v1389
      %v1400 = vpack.c.bf16 %v1392, %v1391
      %v1401 = vld [vmem:[%s8] sm:$0xf]
      %v1402 = vld [vmem:[%s8 + $0x4] sm:$0xf]
      %v1403 = vld [vmem:[%s8 + $0x8] sm:$0xf]
      %v1404 = vld [vmem:[%s8 + $0xc] sm:$0xf]
      %v1405 = vld [vmem:[%s8 + $0x10] sm:$0xf]
      %v1406 = vld [vmem:[%s8 + $0x14] sm:$0xf]
      %v1407 = vld [vmem:[%s8 + $0x18] sm:$0xf]
      %v1408 = vld [vmem:[%s8 + $0x1c] sm:$0xf]
      %v1409 = vld [vmem:[%s8 + $0x20] sm:$0xf]
      %v1410 = vld [vmem:[%s8 + $0x24] sm:$0xf]
      %v1411 = vld [vmem:[%s8 + $0x28] sm:$0xf]
      %v1412 = vld [vmem:[%s8 + $0x2c] sm:$0xf]
      %v1413 = vld [vmem:[%s8 + $0x30] sm:$0xf]
      %v1414 = vld [vmem:[%s8 + $0x34] sm:$0xf]
      %v1415 = vld [vmem:[%s8 + $0x38] sm:$0xf]
      %v1416 = vld [vmem:[%s8 + $0x3c] sm:$0xf]
      %v1417 = vld [vmem:[%s9] sm:$0x1]
      %v1419 = vlaneseq
      %v1420 = vshrl.u32 %v1419, 7
      %v1421 = vsub.s32 0, %v1420
      %v1422 = vrot.slane %v1417, %v1421
      %v1440 = vunpack.c.l.b16 %v1401
      %v1441 = vunpack.c.l.b16 %v1402
      %v1442 = vunpack.c.l.b16 %v1403
      %v1443 = vunpack.c.l.b16 %v1404
      %v1444 = vunpack.c.l.b16 %v1405
      %v1445 = vunpack.c.l.b16 %v1406
      %v1446 = vunpack.c.l.b16 %v1407
      %v1447 = vunpack.c.l.b16 %v1408
      %v1448 = vunpack.c.l.b16 %v1409
      %v1449 = vunpack.c.l.b16 %v1410
      %v1450 = vunpack.c.l.b16 %v1411
      %v1451 = vunpack.c.l.b16 %v1412
      %v1452 = vunpack.c.l.b16 %v1413
      %v1453 = vunpack.c.l.b16 %v1414
      %v1454 = vunpack.c.l.b16 %v1415
      %v1455 = vunpack.c.l.b16 %v1416
      %v1456 = vpack.c.b16 %v1441, %v1440
      %v1457 = vpack.c.b16 %v1443, %v1442
      %v1458 = vpack.c.b16 %v1445, %v1444
      %v1459 = vpack.c.b16 %v1447, %v1446
      %v1460 = vpack.c.b16 %v1449, %v1448
      %v1461 = vpack.c.b16 %v1451, %v1450
      %v1462 = vpack.c.b16 %v1453, %v1452
      %v1463 = vpack.c.b16 %v1455, %v1454
      %1472 = vmatprep.subr.bf16.mxu0 0
      %1473 = vmatpush1.bf16.msra.mxu0 %v1456
      %1474 = vmatprep.subr.bf16.mxu0 0
      %1475 = vmatpush1.bf16.msra.mxu0 %v1457
      %1476 = vmatprep.subr.bf16.mxu0 0
      %1477 = vmatpush1.bf16.msra.mxu0 %v1458
      %1478 = vmatprep.subr.bf16.mxu0 0
      %1479 = vmatpush1.bf16.msra.mxu0 %v1459
      %1480 = vmatprep.subr.bf16.mxu0 0
      %1481 = vmatpush1.bf16.msra.mxu0 %v1460
      %1482 = vmatprep.subr.bf16.mxu0 0
      %1483 = vmatpush1.bf16.msra.mxu0 %v1461
      %1484 = vmatprep.subr.bf16.mxu0 0
      %1485 = vmatpush1.bf16.msra.mxu0 %v1462
      %1486 = vmatprep.subr.bf16.mxu0 0
      %1487 = vmatpush1.bf16.msra.mxu0 %v1463
      %1488 = vmatprep.subr.bf16.mxu0 0
      %1489 = vmatpush1.bf16.msra.mxu0 0
      %1490 = vmatprep.subr.bf16.mxu0 0
      %1491 = vmatpush1.bf16.msra.mxu0 0
      %1492 = vmatprep.subr.bf16.mxu0 0
      %1493 = vmatpush1.bf16.msra.mxu0 0
      %1494 = vmatprep.subr.bf16.mxu0 0
      %1495 = vmatpush1.bf16.msra.mxu0 0
      %1496 = vmatprep.subr.bf16.mxu0 0
      %1497 = vmatpush1.bf16.msra.mxu0 0
      %1498 = vmatprep.subr.bf16.mxu0 0
      %1499 = vmatpush1.bf16.msra.mxu0 0
      %1500 = vmatprep.subr.bf16.mxu0 0
      %1501 = vmatpush1.bf16.msra.mxu0 0
      %1502 = vmatprep.subr.bf16.mxu0 0
      %1503 = vmatpush1.bf16.msra.mxu0 0
      %1504 = vmatprep.mubr.bf16.mxu0 0
      %1505 = vmatmul.mubr.bf16.gmra.mrb[0].mxu0 %v1393
      %v1506 = vpop.f32.mrb[0].mxu0
      %v1507 = vadd.f32 %v1422, %v1506
      %v1508 = vpop.f32.mrb[0].mxu0
      %v1509 = vpop.f32.mrb[0].mxu0
      %v1510 = vadd.f32 %v1422, %v1509
      %v1511 = vpop.f32.mrb[0].mxu0
      %1512 = vmatprep.mubr.bf16.mxu0 0
      %1513 = vmatmul.mubr.bf16.gmra.mrb[0].mxu0 %v1394
      %v1514 = vpop.f32.mrb[0].mxu0
      %v1515 = vadd.f32 %v1422, %v1514
      %v1516 = vpop.f32.mrb[0].mxu0
      %v1517 = vpop.f32.mrb[0].mxu0
      %v1518 = vadd.f32 %v1422, %v1517
      %v1519 = vpop.f32.mrb[0].mxu0
      %1520 = vmatprep.mubr.bf16.mxu0 0
      %1521 = vmatmul.mubr.bf16.gmra.mrb[0].mxu0 %v1395
      %v1522 = vpop.f32.mrb[0].mxu0
      %v1523 = vadd.f32 %v1422, %v1522
      %v1524 = vpop.f32.mrb[0].mxu0
      %v1525 = vpop.f32.mrb[0].mxu0
      %v1526 = vadd.f32 %v1422, %v1525
      %v1527 = vpop.f32.mrb[0].mxu0
      %1528 = vmatprep.mubr.bf16.mxu0 0
      %1529 = vmatmul.mubr.bf16.gmra.mrb[0].mxu0 %v1396
      %v1530 = vpop.f32.mrb[0].mxu0
      %v1531 = vadd.f32 %v1422, %v1530
      %v1532 = vpop.f32.mrb[0].mxu0
      %v1533 = vpop.f32.mrb[0].mxu0
      %v1534 = vadd.f32 %v1422, %v1533
      %v1535 = vpop.f32.mrb[0].mxu0
      %1536 = vmatprep.mubr.bf16.mxu0 0
      %1537 = vmatmul.mubr.bf16.gmra.mrb[0].mxu0 %v1397
      %v1538 = vpop.f32.mrb[0].mxu0
      %v1539 = vadd.f32 %v1422, %v1538
      %v1540 = vpop.f32.mrb[0].mxu0
      %v1541 = vpop.f32.mrb[0].mxu0
      %v1542 = vadd.f32 %v1422, %v1541
      %v1543 = vpop.f32.mrb[0].mxu0
      %1544 = vmatprep.mubr.bf16.mxu0 0
      %1545 = vmatmul.mubr.bf16.gmra.mrb[0].mxu0 %v1398
      %v1546 = vpop.f32.mrb[0].mxu0
      %v1547 = vadd.f32 %v1422, %v1546
      %v1548 = vpop.f32.mrb[0].mxu0
      %v1549 = vpop.f32.mrb[0].mxu0
      %v1550 = vadd.f32 %v1422, %v1549
      %v1551 = vpop.f32.mrb[0].mxu0
      %1552 = vmatprep.mubr.bf16.mxu0 0
      %1553 = vmatmul.mubr.bf16.gmra.mrb[0].mxu0 %v1399
      %v1554 = vpop.f32.mrb[0].mxu0
      %v1555 = vadd.f32 %v1422, %v1554
      %v1556 = vpop.f32.mrb[0].mxu0
      %v1557 = vpop.f32.mrb[0].mxu0
      %v1558 = vadd.f32 %v1422, %v1557
      %v1559 = vpop.f32.mrb[0].mxu0
      %1560 = vmatprep.mubr.bf16.mxu0 0
      %1561 = vmatmul.mubr.bf16.gmra.mrb[0].mxu0 %v1400
      %v1562 = vpop.f32.mrb[0].mxu0
      %v1563 = vadd.f32 %v1422, %v1562
      %v1564 = vpop.f32.mrb[0].mxu0
      %v1565 = vpop.f32.mrb[0].mxu0
      %v1566 = vadd.f32 %v1422, %v1565
      %v1567 = vpop.f32.mrb[0].mxu0
      %1568 = vdwg.mxu0
      %v1569 = vmax.f32 %v1507, 0.0
      %v1570 = vmax.f32 %v1510, 0.0
      %v1571 = vmax.f32 %v1515, 0.0
      %v1572 = vmax.f32 %v1518, 0.0
      %v1573 = vmax.f32 %v1523, 0.0
      %v1574 = vmax.f32 %v1526, 0.0
      %v1575 = vmax.f32 %v1531, 0.0
      %v1576 = vmax.f32 %v1534, 0.0
      %v1577 = vmax.f32 %v1539, 0.0
      %v1578 = vmax.f32 %v1542, 0.0
      %v1579 = vmax.f32 %v1547, 0.0
      %v1580 = vmax.f32 %v1550, 0.0
      %v1581 = vmax.f32 %v1555, 0.0
      %v1582 = vmax.f32 %v1558, 0.0
      %v1583 = vmax.f32 %v1563, 0.0
      %v1584 = vmax.f32 %v1566, 0.0
      %v1585 = vpack.c.bf16 %v1570, %v1569
      %v1586 = vpack.c.bf16 %v1572, %v1571
      %v1587 = vpack.c.bf16 %v1574, %v1573
      %v1588 = vpack.c.bf16 %v1576, %v1575
      %v1589 = vpack.c.bf16 %v1578, %v1577
      %v1590 = vpack.c.bf16 %v1580, %v1579
      %v1591 = vpack.c.bf16 %v1582, %v1581
      %v1592 = vpack.c.bf16 %v1584, %v1583
      %v1593 = vld [vmem:[%s10] sm:$0xf]
      %v1594 = vld [vmem:[%s10 + $0x4] sm:$0xf]
      %v1595 = vld [vmem:[%s10 + $0x8] sm:$0xf]
      %v1596 = vld [vmem:[%s10 + $0xc] sm:$0xf]
      %v1597 = vld [vmem:[%s10 + $0x10] sm:$0xf]
      %v1598 = vld [vmem:[%s10 + $0x14] sm:$0xf]
      %v1599 = vld [vmem:[%s10 + $0x18] sm:$0xf]
      %v1600 = vld [vmem:[%s10 + $0x1c] sm:$0xf]
      %v1601 = vld [vmem:[%s10 + $0x20] sm:$0xf]
      %v1602 = vld [vmem:[%s10 + $0x24] sm:$0xf]
      %v1603 = vld [vmem:[%s10 + $0x28] sm:$0xf]
      %v1604 = vld [vmem:[%s10 + $0x2c] sm:$0xf]
      %v1605 = vld [vmem:[%s10 + $0x30] sm:$0xf]
      %v1606 = vld [vmem:[%s10 + $0x34] sm:$0xf]
      %v1607 = vld [vmem:[%s10 + $0x38] sm:$0xf]
      %v1608 = vld [vmem:[%s10 + $0x3c] sm:$0xf]
      %v1609 = vld [vmem:[%s11] sm:$0x1]
      %v1611 = vlaneseq
      %v1612 = vshrl.u32 %v1611, 7
      %v1613 = vsub.s32 0, %v1612
      %v1614 = vrot.slane %v1609, %v1613
      %v1632 = vunpack.c.l.b16 %v1593
      %v1633 = vunpack.c.l.b16 %v1594
      %v1634 = vunpack.c.l.b16 %v1595
      %v1635 = vunpack.c.l.b16 %v1596
      %v1636 = vunpack.c.l.b16 %v1597
      %v1637 = vunpack.c.l.b16 %v1598
      %v1638 = vunpack.c.l.b16 %v1599
      %v1639 = vunpack.c.l.b16 %v1600
      %v1640 = vunpack.c.l.b16 %v1601
      %v1641 = vunpack.c.l.b16 %v1602
      %v1642 = vunpack.c.l.b16 %v1603
      %v1643 = vunpack.c.l.b16 %v1604
      %v1644 = vunpack.c.l.b16 %v1605
      %v1645 = vunpack.c.l.b16 %v1606
      %v1646 = vunpack.c.l.b16 %v1607
      %v1647 = vunpack.c.l.b16 %v1608
      %v1648 = vpack.c.b16 %v1633, %v1632
      %v1649 = vpack.c.b16 %v1635, %v1634
      %v1650 = vpack.c.b16 %v1637, %v1636
      %v1651 = vpack.c.b16 %v1639, %v1638
      %v1652 = vpack.c.b16 %v1641, %v1640
      %v1653 = vpack.c.b16 %v1643, %v1642
      %v1654 = vpack.c.b16 %v1645, %v1644
      %v1655 = vpack.c.b16 %v1647, %v1646
      %1664 = vmatprep.subr.bf16.mxu0 0
      %1665 = vmatpush1.bf16.msra.mxu0 %v1648
      %1666 = vmatprep.subr.bf16.mxu0 0
      %1667 = vmatpush1.bf16.msra.mxu0 %v1649
      %1668 = vmatprep.subr.bf16.mxu0 0
      %1669 = vmatpush1.bf16.msra.mxu0 %v1650
      %1670 = vmatprep.subr.bf16.mxu0 0
      %1671 = vmatpush1.bf16.msra.mxu0 %v1651
      %1672 = vmatprep.subr.bf16.mxu0 0
      %1673 = vmatpush1.bf16.msra.mxu0 %v1652
      %1674 = vmatprep.subr.bf16.mxu0 0
      %1675 = vmatpush1.bf16.msra.mxu0 %v1653
      %1676 = vmatprep.subr.bf16.mxu0 0
      %1677 = vmatpush1.bf16.msra.mxu0 %v1654
      %1678 = vmatprep.subr.bf16.mxu0 0
      %1679 = vmatpush1.bf16.msra.mxu0 %v1655
      %1680 = vmatprep.subr.bf16.mxu0 0
      %1681 = vmatpush1.bf16.msra.mxu0 0
      %1682 = vmatprep.subr.bf16.mxu0 0
      %1683 = vmatpush1.bf16.msra.mxu0 0
      %1684 = vmatprep.subr.bf16.mxu0 0
      %1685 = vmatpush1.bf16.msra.mxu0 0
      %1686 = vmatprep.subr.bf16.mxu0 0
      %1687 = vmatpush1.bf16.msra.mxu0 0
      %1688 = vmatprep.subr.bf16.mxu0 0
      %1689 = vmatpush1.bf16.msra.mxu0 0
      %1690 = vmatprep.subr.bf16.mxu0 0
      %1691 = vmatpush1.bf16.msra.mxu0 0
      %1692 = vmatprep.subr.bf16.mxu0 0
      %1693 = vmatpush1.bf16.msra.mxu0 0
      %1694 = vmatprep.subr.bf16.mxu0 0
      %1695 = vmatpush1.bf16.msra.mxu0 0
      %1696 = vmatprep.mubr.bf16.mxu0 0
      %1697 = vmatmul.mubr.bf16.gmra.mrb[0].mxu0 %v1585
      %v1698 = vpop.f32.mrb[0].mxu0
      %v1699 = vadd.f32 %v1614, %v1698
      %v1700 = vpop.f32.mrb[0].mxu0
      %v1701 = vpop.f32.mrb[0].mxu0
      %v1702 = vadd.f32 %v1614, %v1701
      %v1703 = vpop.f32.mrb[0].mxu0
      %1704 = vmatprep.mubr.bf16.mxu0 0
      %1705 = vmatmul.mubr.bf16.gmra.mrb[0].mxu0 %v1586
      %v1706 = vpop.f32.mrb[0].mxu0
      %v1707 = vadd.f32 %v1614, %v1706
      %v1708 = vpop.f32.mrb[0].mxu0
      %v1709 = vpop.f32.mrb[0].mxu0
      %v1710 = vadd.f32 %v1614, %v1709
      %v1711 = vpop.f32.mrb[0].mxu0
      %1712 = vmatprep.mubr.bf16.mxu0 0
      %1713 = vmatmul.mubr.bf16.gmra.mrb[0].mxu0 %v1587
      %v1714 = vpop.f32.mrb[0].mxu0
      %v1715 = vadd.f32 %v1614, %v1714
      %v1716 = vpop.f32.mrb[0].mxu0
      %v1717 = vpop.f32.mrb[0].mxu0
      %v1718 = vadd.f32 %v1614, %v1717
      %v1719 = vpop.f32.mrb[0].mxu0
      %1720 = vmatprep.mubr.bf16.mxu0 0
      %1721 = vmatmul.mubr.bf16.gmra.mrb[0].mxu0 %v1588
      %v1722 = vpop.f32.mrb[0].mxu0
      %v1723 = vadd.f32 %v1614, %v1722
      %v1724 = vpop.f32.mrb[0].mxu0
      %v1725 = vpop.f32.mrb[0].mxu0
      %v1726 = vadd.f32 %v1614, %v1725
      %v1727 = vpop.f32.mrb[0].mxu0
      %1728 = vmatprep.mubr.bf16.mxu0 0
      %1729 = vmatmul.mubr.bf16.gmra.mrb[0].mxu0 %v1589
      %v1730 = vpop.f32.mrb[0].mxu0
      %v1731 = vadd.f32 %v1614, %v1730
      %v1732 = vpop.f32.mrb[0].mxu0
      %v1733 = vpop.f32.mrb[0].mxu0
      %v1734 = vadd.f32 %v1614, %v1733
      %v1735 = vpop.f32.mrb[0].mxu0
      %1736 = vmatprep.mubr.bf16.mxu0 0
      %1737 = vmatmul.mubr.bf16.gmra.mrb[0].mxu0 %v1590
      %v1738 = vpop.f32.mrb[0].mxu0
      %v1739 = vadd.f32 %v1614, %v1738
      %v1740 = vpop.f32.mrb[0].mxu0
      %v1741 = vpop.f32.mrb[0].mxu0
      %v1742 = vadd.f32 %v1614, %v1741
      %v1743 = vpop.f32.mrb[0].mxu0
      %1744 = vmatprep.mubr.bf16.mxu0 0
      %1745 = vmatmul.mubr.bf16.gmra.mrb[0].mxu0 %v1591
      %v1746 = vpop.f32.mrb[0].mxu0
      %v1747 = vadd.f32 %v1614, %v1746
      %v1748 = vpop.f32.mrb[0].mxu0
      %v1749 = vpop.f32.mrb[0].mxu0
      %v1750 = vadd.f32 %v1614, %v1749
      %v1751 = vpop.f32.mrb[0].mxu0
      %1752 = vmatprep.mubr.bf16.mxu0 0
      %1753 = vmatmul.mubr.bf16.gmra.mrb[0].mxu0 %v1592
      %v1754 = vpop.f32.mrb[0].mxu0
      %v1755 = vadd.f32 %v1614, %v1754
      %v1756 = vpop.f32.mrb[0].mxu0
      %v1757 = vpop.f32.mrb[0].mxu0
      %v1758 = vadd.f32 %v1614, %v1757
      %v1759 = vpop.f32.mrb[0].mxu0
      %1760 = vdwg.mxu0
      %v1761 = vmax.f32 %v1699, 0.0
      %v1762 = vmax.f32 %v1702, 0.0
      %v1763 = vmax.f32 %v1707, 0.0
      %v1764 = vmax.f32 %v1710, 0.0
      %v1765 = vmax.f32 %v1715, 0.0
      %v1766 = vmax.f32 %v1718, 0.0
      %v1767 = vmax.f32 %v1723, 0.0
      %v1768 = vmax.f32 %v1726, 0.0
      %v1769 = vmax.f32 %v1731, 0.0
      %v1770 = vmax.f32 %v1734, 0.0
      %v1771 = vmax.f32 %v1739, 0.0
      %v1772 = vmax.f32 %v1742, 0.0
      %v1773 = vmax.f32 %v1747, 0.0
      %v1774 = vmax.f32 %v1750, 0.0
      %v1775 = vmax.f32 %v1755, 0.0
      %v1776 = vmax.f32 %v1758, 0.0
      %v1777 = vpack.c.bf16 %v1762, %v1761
      %v1778 = vpack.c.bf16 %v1764, %v1763
      %v1779 = vpack.c.bf16 %v1766, %v1765
      %v1780 = vpack.c.bf16 %v1768, %v1767
      %v1781 = vpack.c.bf16 %v1770, %v1769
      %v1782 = vpack.c.bf16 %v1772, %v1771
      %v1783 = vpack.c.bf16 %v1774, %v1773
      %v1784 = vpack.c.bf16 %v1776, %v1775
      %v1785 = vld [vmem:[%s12] sm:$0xf]
      %v1786 = vld [vmem:[%s12 + $0x4] sm:$0xf]
      %v1787 = vld [vmem:[%s12 + $0x8] sm:$0xf]
      %v1788 = vld [vmem:[%s12 + $0xc] sm:$0xf]
      %v1789 = vld [vmem:[%s12 + $0x10] sm:$0xf]
      %v1790 = vld [vmem:[%s12 + $0x14] sm:$0xf]
      %v1791 = vld [vmem:[%s12 + $0x18] sm:$0xf]
      %v1792 = vld [vmem:[%s12 + $0x1c] sm:$0xf]
      %v1793 = vld [vmem:[%s12 + $0x20] sm:$0xf]
      %v1794 = vld [vmem:[%s12 + $0x24] sm:$0xf]
      %v1795 = vld [vmem:[%s12 + $0x28] sm:$0xf]
      %v1796 = vld [vmem:[%s12 + $0x2c] sm:$0xf]
      %v1797 = vld [vmem:[%s12 + $0x30] sm:$0xf]
      %v1798 = vld [vmem:[%s12 + $0x34] sm:$0xf]
      %v1799 = vld [vmem:[%s12 + $0x38] sm:$0xf]
      %v1800 = vld [vmem:[%s12 + $0x3c] sm:$0xf]
      %v1801 = vld [vmem:[%s13] sm:$0x1]
      %v1803 = vlaneseq
      %v1804 = vshrl.u32 %v1803, 7
      %v1805 = vsub.s32 0, %v1804
      %v1806 = vrot.slane %v1801, %v1805
      %v1824 = vunpack.c.l.b16 %v1785
      %v1825 = vunpack.c.l.b16 %v1786
      %v1826 = vunpack.c.l.b16 %v1787
      %v1827 = vunpack.c.l.b16 %v1788
      %v1828 = vunpack.c.l.b16 %v1789
      %v1829 = vunpack.c.l.b16 %v1790
      %v1830 = vunpack.c.l.b16 %v1791
      %v1831 = vunpack.c.l.b16 %v1792
      %v1832 = vunpack.c.l.b16 %v1793
      %v1833 = vunpack.c.l.b16 %v1794
      %v1834 = vunpack.c.l.b16 %v1795
      %v1835 = vunpack.c.l.b16 %v1796
      %v1836 = vunpack.c.l.b16 %v1797
      %v1837 = vunpack.c.l.b16 %v1798
      %v1838 = vunpack.c.l.b16 %v1799
      %v1839 = vunpack.c.l.b16 %v1800
      %v1840 = vpack.c.b16 %v1825, %v1824
      %v1841 = vpack.c.b16 %v1827, %v1826
      %v1842 = vpack.c.b16 %v1829, %v1828
      %v1843 = vpack.c.b16 %v1831, %v1830
      %v1844 = vpack.c.b16 %v1833, %v1832
      %v1845 = vpack.c.b16 %v1835, %v1834
      %v1846 = vpack.c.b16 %v1837, %v1836
      %v1847 = vpack.c.b16 %v1839, %v1838
      %1856 = vmatprep.subr.bf16.mxu0 0
      %1857 = vmatpush1.bf16.msra.mxu0 %v1840
      %1858 = vmatprep.subr.bf16.mxu0 0
      %1859 = vmatpush1.bf16.msra.mxu0 %v1841
      %1860 = vmatprep.subr.bf16.mxu0 0
      %1861 = vmatpush1.bf16.msra.mxu0 %v1842
      %1862 = vmatprep.subr.bf16.mxu0 0
      %1863 = vmatpush1.bf16.msra.mxu0 %v1843
      %1864 = vmatprep.subr.bf16.mxu0 0
      %1865 = vmatpush1.bf16.msra.mxu0 %v1844
      %1866 = vmatprep.subr.bf16.mxu0 0
      %1867 = vmatpush1.bf16.msra.mxu0 %v1845
      %1868 = vmatprep.subr.bf16.mxu0 0
      %1869 = vmatpush1.bf16.msra.mxu0 %v1846
      %1870 = vmatprep.subr.bf16.mxu0 0
      %1871 = vmatpush1.bf16.msra.mxu0 %v1847
      %1872 = vmatprep.subr.bf16.mxu0 0
      %1873 = vmatpush1.bf16.msra.mxu0 0
      %1874 = vmatprep.subr.bf16.mxu0 0
      %1875 = vmatpush1.bf16.msra.mxu0 0
      %1876 = vmatprep.subr.bf16.mxu0 0
      %1877 = vmatpush1.bf16.msra.mxu0 0
      %1878 = vmatprep.subr.bf16.mxu0 0
      %1879 = vmatpush1.bf16.msra.mxu0 0
      %1880 = vmatprep.subr.bf16.mxu0 0
      %1881 = vmatpush1.bf16.msra.mxu0 0
      %1882 = vmatprep.subr.bf16.mxu0 0
      %1883 = vmatpush1.bf16.msra.mxu0 0
      %1884 = vmatprep.subr.bf16.mxu0 0
      %1885 = vmatpush1.bf16.msra.mxu0 0
      %1886 = vmatprep.subr.bf16.mxu0 0
      %1887 = vmatpush1.bf16.msra.mxu0 0
      %1888 = vmatprep.mubr.bf16.mxu0 0
      %1889 = vmatmul.mubr.bf16.gmra.mrb[0].mxu0 %v1777
      %v1890 = vpop.f32.mrb[0].mxu0
      %v1891 = vadd.f32 %v1806, %v1890
      %v1892 = vpop.f32.mrb[0].mxu0
      %v1893 = vpop.f32.mrb[0].mxu0
      %v1894 = vadd.f32 %v1806, %v1893
      %v1895 = vpop.f32.mrb[0].mxu0
      %1896 = vmatprep.mubr.bf16.mxu0 0
      %1897 = vmatmul.mubr.bf16.gmra.mrb[0].mxu0 %v1778
      %v1898 = vpop.f32.mrb[0].mxu0
      %v1899 = vadd.f32 %v1806, %v1898
      %v1900 = vpop.f32.mrb[0].mxu0
      %v1901 = vpop.f32.mrb[0].mxu0
      %v1902 = vadd.f32 %v1806, %v1901
      %v1903 = vpop.f32.mrb[0].mxu0
      %1904 = vmatprep.mubr.bf16.mxu0 0
      %1905 = vmatmul.mubr.bf16.gmra.mrb[0].mxu0 %v1779
      %v1906 = vpop.f32.mrb[0].mxu0
      %v1907 = vadd.f32 %v1806, %v1906
      %v1908 = vpop.f32.mrb[0].mxu0
      %v1909 = vpop.f32.mrb[0].mxu0
      %v1910 = vadd.f32 %v1806, %v1909
      %v1911 = vpop.f32.mrb[0].mxu0
      %1912 = vmatprep.mubr.bf16.mxu0 0
      %1913 = vmatmul.mubr.bf16.gmra.mrb[0].mxu0 %v1780
      %v1914 = vpop.f32.mrb[0].mxu0
      %v1915 = vadd.f32 %v1806, %v1914
      %v1916 = vpop.f32.mrb[0].mxu0
      %v1917 = vpop.f32.mrb[0].mxu0
      %v1918 = vadd.f32 %v1806, %v1917
      %v1919 = vpop.f32.mrb[0].mxu0
      %1920 = vmatprep.mubr.bf16.mxu0 0
      %1921 = vmatmul.mubr.bf16.gmra.mrb[0].mxu0 %v1781
      %v1922 = vpop.f32.mrb[0].mxu0
      %v1923 = vadd.f32 %v1806, %v1922
      %v1924 = vpop.f32.mrb[0].mxu0
      %v1925 = vpop.f32.mrb[0].mxu0
      %v1926 = vadd.f32 %v1806, %v1925
      %v1927 = vpop.f32.mrb[0].mxu0
      %1928 = vmatprep.mubr.bf16.mxu0 0
      %1929 = vmatmul.mubr.bf16.gmra.mrb[0].mxu0 %v1782
      %v1930 = vpop.f32.mrb[0].mxu0
      %v1931 = vadd.f32 %v1806, %v1930
      %v1932 = vpop.f32.mrb[0].mxu0
      %v1933 = vpop.f32.mrb[0].mxu0
      %v1934 = vadd.f32 %v1806, %v1933
      %v1935 = vpop.f32.mrb[0].mxu0
      %1936 = vmatprep.mubr.bf16.mxu0 0
      %1937 = vmatmul.mubr.bf16.gmra.mrb[0].mxu0 %v1783
      %v1938 = vpop.f32.mrb[0].mxu0
      %v1939 = vadd.f32 %v1806, %v1938
      %v1940 = vpop.f32.mrb[0].mxu0
      %v1941 = vpop.f32.mrb[0].mxu0
      %v1942 = vadd.f32 %v1806, %v1941
      %v1943 = vpop.f32.mrb[0].mxu0
      %1944 = vmatprep.mubr.bf16.mxu0 0
      %1945 = vmatmul.mubr.bf16.gmra.mrb[0].mxu0 %v1784
      %v1946 = vpop.f32.mrb[0].mxu0
      %v1947 = vadd.f32 %v1806, %v1946
      %v1948 = vpop.f32.mrb[0].mxu0
      %v1949 = vpop.f32.mrb[0].mxu0
      %v1950 = vadd.f32 %v1806, %v1949
      %v1951 = vpop.f32.mrb[0].mxu0
      %1952 = vdwg.mxu0
      %v1953 = vmax.f32 %v1891, 0.0
      %v1954 = vmax.f32 %v1894, 0.0
      %v1955 = vmax.f32 %v1899, 0.0
      %v1956 = vmax.f32 %v1902, 0.0
      %v1957 = vmax.f32 %v1907, 0.0
      %v1958 = vmax.f32 %v1910, 0.0
      %v1959 = vmax.f32 %v1915, 0.0
      %v1960 = vmax.f32 %v1918, 0.0
      %v1961 = vmax.f32 %v1923, 0.0
      %v1962 = vmax.f32 %v1926, 0.0
      %v1963 = vmax.f32 %v1931, 0.0
      %v1964 = vmax.f32 %v1934, 0.0
      %v1965 = vmax.f32 %v1939, 0.0
      %v1966 = vmax.f32 %v1942, 0.0
      %v1967 = vmax.f32 %v1947, 0.0
      %v1968 = vmax.f32 %v1950, 0.0
      %v1969 = vpack.c.bf16 %v1954, %v1953
      %v1970 = vpack.c.bf16 %v1956, %v1955
      %v1971 = vpack.c.bf16 %v1958, %v1957
      %v1972 = vpack.c.bf16 %v1960, %v1959
      %v1973 = vpack.c.bf16 %v1962, %v1961
      %v1974 = vpack.c.bf16 %v1964, %v1963
      %v1975 = vpack.c.bf16 %v1966, %v1965
      %v1976 = vpack.c.bf16 %v1968, %v1967
      %v1977 = vld [vmem:[%s14] sm:$0xff]
      %v1978 = vld [vmem:[%s14 + $0x8] sm:$0xff]
      %v1979 = vld [vmem:[%s14 + $0x10] sm:$0xff]
      %v1980 = vld [vmem:[%s14 + $0x18] sm:$0xff]
      %v1981 = vld [vmem:[%s14 + $0x20] sm:$0xff]
      %v1982 = vld [vmem:[%s14 + $0x28] sm:$0xff]
      %v1983 = vld [vmem:[%s14 + $0x30] sm:$0xff]
      %v1984 = vld [vmem:[%s14 + $0x38] sm:$0xff]
      %v1985 = vld [vmem:[%s14 + $0x40] sm:$0xff]
      %v1986 = vld [vmem:[%s14 + $0x48] sm:$0xff]
      %v1987 = vld [vmem:[%s14 + $0x50] sm:$0xff]
      %v1988 = vld [vmem:[%s14 + $0x58] sm:$0xff]
      %v1989 = vld [vmem:[%s14 + $0x60] sm:$0xff]
      %v1990 = vld [vmem:[%s14 + $0x68] sm:$0xff]
      %v1991 = vld [vmem:[%s14 + $0x70] sm:$0xff]
      %v1992 = vld [vmem:[%s14 + $0x78] sm:$0xff]
      %v1993 = vld [vmem:[%s15] sm:$0x3]
      %v1995 = vlaneseq
      %v1996 = vshrl.u32 %v1995, 7
      %v1997 = vsub.s32 0, %v1996
      %v1998 = vrot.slane %v1993, %v1997
      %v1999 = vlaneseq
      %v2000 = vshrl.u32 %v1999, 7
      %v2001 = vsub.s32 1, %v2000
      %v2002 = vrot.slane %v1993, %v2001
      %v2021 = vunpack.c.l.b16 %v1977
      %v2022 = vunpack.c.h.b16 %v1977
      %v2023 = vunpack.c.l.b16 %v1978
      %v2024 = vunpack.c.h.b16 %v1978
      %v2025 = vunpack.c.l.b16 %v1979
      %v2026 = vunpack.c.h.b16 %v1979
      %v2027 = vunpack.c.l.b16 %v1980
      %v2028 = vunpack.c.h.b16 %v1980
      %v2029 = vunpack.c.l.b16 %v1981
      %v2030 = vunpack.c.h.b16 %v1981
      %v2031 = vunpack.c.l.b16 %v1982
      %v2032 = vunpack.c.h.b16 %v1982
      %v2033 = vunpack.c.l.b16 %v1983
      %v2034 = vunpack.c.h.b16 %v1983
      %v2035 = vunpack.c.l.b16 %v1984
      %v2036 = vunpack.c.h.b16 %v1984
      %v2037 = vunpack.c.l.b16 %v1985
      %v2038 = vunpack.c.h.b16 %v1985
      %v2039 = vunpack.c.l.b16 %v1986
      %v2040 = vunpack.c.h.b16 %v1986
      %v2041 = vunpack.c.l.b16 %v1987
      %v2042 = vunpack.c.h.b16 %v1987
      %v2043 = vunpack.c.l.b16 %v1988
      %v2044 = vunpack.c.h.b16 %v1988
      %v2045 = vunpack.c.l.b16 %v1989
      %v2046 = vunpack.c.h.b16 %v1989
      %v2047 = vunpack.c.l.b16 %v1990
      %v2048 = vunpack.c.h.b16 %v1990
      %v2049 = vunpack.c.l.b16 %v1991
      %v2050 = vunpack.c.h.b16 %v1991
      %v2051 = vunpack.c.l.b16 %v1992
      %v2052 = vunpack.c.h.b16 %v1992
      %v2053 = vpack.c.b16 %v2023, %v2021
      %v2054 = vpack.c.b16 %v2024, %v2022
      %v2055 = vpack.c.b16 %v2027, %v2025
      %v2056 = vpack.c.b16 %v2028, %v2026
      %v2057 = vpack.c.b16 %v2031, %v2029
      %v2058 = vpack.c.b16 %v2032, %v2030
      %v2059 = vpack.c.b16 %v2035, %v2033
      %v2060 = vpack.c.b16 %v2036, %v2034
      %v2061 = vpack.c.b16 %v2039, %v2037
      %v2062 = vpack.c.b16 %v2040, %v2038
      %v2063 = vpack.c.b16 %v2043, %v2041
      %v2064 = vpack.c.b16 %v2044, %v2042
      %v2065 = vpack.c.b16 %v2047, %v2045
      %v2066 = vpack.c.b16 %v2048, %v2046
      %v2067 = vpack.c.b16 %v2051, %v2049
      %v2068 = vpack.c.b16 %v2052, %v2050
      %2085 = vmatprep.subr.bf16.mxu0 %v2054
      %2086 = vmatpush1.bf16.msra.mxu0 %v2053
      %2087 = vmatprep.subr.bf16.mxu0 %v2056
      %2088 = vmatpush1.bf16.msra.mxu0 %v2055
      %2089 = vmatprep.subr.bf16.mxu0 %v2058
      %2090 = vmatpush1.bf16.msra.mxu0 %v2057
      %2091 = vmatprep.subr.bf16.mxu0 %v2060
      %2092 = vmatpush1.bf16.msra.mxu0 %v2059
      %2093 = vmatprep.subr.bf16.mxu0 %v2062
      %2094 = vmatpush1.bf16.msra.mxu0 %v2061
      %2095 = vmatprep.subr.bf16.mxu0 %v2064
      %2096 = vmatpush1.bf16.msra.mxu0 %v2063
      %2097 = vmatprep.subr.bf16.mxu0 %v2066
      %2098 = vmatpush1.bf16.msra.mxu0 %v2065
      %2099 = vmatprep.subr.bf16.mxu0 %v2068
      %2100 = vmatpush1.bf16.msra.mxu0 %v2067
      %2101 = vmatprep.subr.bf16.mxu0 0
      %2102 = vmatpush1.bf16.msra.mxu0 0
      %2103 = vmatprep.subr.bf16.mxu0 0
      %2104 = vmatpush1.bf16.msra.mxu0 0
      %2105 = vmatprep.subr.bf16.mxu0 0
      %2106 = vmatpush1.bf16.msra.mxu0 0
      %2107 = vmatprep.subr.bf16.mxu0 0
      %2108 = vmatpush1.bf16.msra.mxu0 0
      %2109 = vmatprep.subr.bf16.mxu0 0
      %2110 = vmatpush1.bf16.msra.mxu0 0
      %2111 = vmatprep.subr.bf16.mxu0 0
      %2112 = vmatpush1.bf16.msra.mxu0 0
      %2113 = vmatprep.subr.bf16.mxu0 0
      %2114 = vmatpush1.bf16.msra.mxu0 0
      %2115 = vmatprep.subr.bf16.mxu0 0
      %2116 = vmatpush1.bf16.msra.mxu0 0
      %2117 = vmatprep.mubr.bf16.mxu0 0
      %2118 = vmatmul.mubr.bf16.gmra.mrb[0].mxu0 %v1969
      %v2119 = vpop.f32.mrb[0].mxu0
      %v2120 = vadd.f32 %v1998, %v2119
      %v2121 = vpop.f32.mrb[0].mxu0
      %v2122 = vadd.f32 %v2002, %v2121
      %v2123 = vpop.f32.mrb[0].mxu0
      %v2124 = vadd.f32 %v1998, %v2123
      %v2125 = vpop.f32.mrb[0].mxu0
      %v2126 = vadd.f32 %v2002, %v2125
      %2127 = vmatprep.mubr.bf16.mxu0 0
      %2128 = vmatmul.mubr.bf16.gmra.mrb[0].mxu0 %v1970
      %v2129 = vpop.f32.mrb[0].mxu0
      %v2130 = vadd.f32 %v1998, %v2129
      %v2131 = vpop.f32.mrb[0].mxu0
      %v2132 = vadd.f32 %v2002, %v2131
      %v2133 = vpop.f32.mrb[0].mxu0
      %v2134 = vadd.f32 %v1998, %v2133
      %v2135 = vpop.f32.mrb[0].mxu0
      %v2136 = vadd.f32 %v2002, %v2135
      %2137 = vmatprep.mubr.bf16.mxu0 0
      %2138 = vmatmul.mubr.bf16.gmra.mrb[0].mxu0 %v1971
      %v2139 = vpop.f32.mrb[0].mxu0
      %v2140 = vadd.f32 %v1998, %v2139
      %v2141 = vpop.f32.mrb[0].mxu0
      %v2142 = vadd.f32 %v2002, %v2141
      %v2143 = vpop.f32.mrb[0].mxu0
      %v2144 = vadd.f32 %v1998, %v2143
      %v2145 = vpop.f32.mrb[0].mxu0
      %v2146 = vadd.f32 %v2002, %v2145
      %2147 = vmatprep.mubr.bf16.mxu0 0
      %2148 = vmatmul.mubr.bf16.gmra.mrb[0].mxu0 %v1972
      %v2149 = vpop.f32.mrb[0].mxu0
      %v2150 = vadd.f32 %v1998, %v2149
      %v2151 = vpop.f32.mrb[0].mxu0
      %v2152 = vadd.f32 %v2002, %v2151
      %v2153 = vpop.f32.mrb[0].mxu0
      %v2154 = vadd.f32 %v1998, %v2153
      %v2155 = vpop.f32.mrb[0].mxu0
      %v2156 = vadd.f32 %v2002, %v2155
      %2157 = vmatprep.mubr.bf16.mxu0 0
      %2158 = vmatmul.mubr.bf16.gmra.mrb[0].mxu0 %v1973
      %v2159 = vpop.f32.mrb[0].mxu0
      %v2160 = vadd.f32 %v1998, %v2159
      %v2161 = vpop.f32.mrb[0].mxu0
      %v2162 = vadd.f32 %v2002, %v2161
      %v2163 = vpop.f32.mrb[0].mxu0
      %v2164 = vadd.f32 %v1998, %v2163
      %v2165 = vpop.f32.mrb[0].mxu0
      %v2166 = vadd.f32 %v2002, %v2165
      %2167 = vmatprep.mubr.bf16.mxu0 0
      %2168 = vmatmul.mubr.bf16.gmra.mrb[0].mxu0 %v1974
      %v2169 = vpop.f32.mrb[0].mxu0
      %v2170 = vadd.f32 %v1998, %v2169
      %v2171 = vpop.f32.mrb[0].mxu0
      %v2172 = vadd.f32 %v2002, %v2171
      %v2173 = vpop.f32.mrb[0].mxu0
      %v2174 = vadd.f32 %v1998, %v2173
      %v2175 = vpop.f32.mrb[0].mxu0
      %v2176 = vadd.f32 %v2002, %v2175
      %2177 = vmatprep.mubr.bf16.mxu0 0
      %2178 = vmatmul.mubr.bf16.gmra.mrb[0].mxu0 %v1975
      %v2179 = vpop.f32.mrb[0].mxu0
      %v2180 = vadd.f32 %v1998, %v2179
      %v2181 = vpop.f32.mrb[0].mxu0
      %v2182 = vadd.f32 %v2002, %v2181
      %v2183 = vpop.f32.mrb[0].mxu0
      %v2184 = vadd.f32 %v1998, %v2183
      %v2185 = vpop.f32.mrb[0].mxu0
      %v2186 = vadd.f32 %v2002, %v2185
      %2187 = vmatprep.mubr.bf16.mxu0 0
      %2188 = vmatmul.mubr.bf16.gmra.mrb[0].mxu0 %v1976
      %v2189 = vpop.f32.mrb[0].mxu0
      %v2190 = vadd.f32 %v1998, %v2189
      %v2191 = vpop.f32.mrb[0].mxu0
      %v2192 = vadd.f32 %v2002, %v2191
      %v2193 = vpop.f32.mrb[0].mxu0
      %v2194 = vadd.f32 %v1998, %v2193
      %v2195 = vpop.f32.mrb[0].mxu0
      %v2196 = vadd.f32 %v2002, %v2195
      %2197 = vdwg.mxu0
      %v2198 = vmul.f32 %v2120, %v2120
      %v2199 = vmul.f32 %v2124, %v2124
      %v2200 = vmul.f32 %v2130, %v2130
      %v2201 = vmul.f32 %v2134, %v2134
      %v2202 = vmul.f32 %v2140, %v2140
      %v2203 = vmul.f32 %v2144, %v2144
      %v2204 = vmul.f32 %v2150, %v2150
      %v2205 = vmul.f32 %v2154, %v2154
      %v2206 = vmul.f32 %v2160, %v2160
      %v2207 = vmul.f32 %v2164, %v2164
      %v2208 = vmul.f32 %v2170, %v2170
      %v2209 = vmul.f32 %v2174, %v2174
      %v2210 = vmul.f32 %v2180, %v2180
      %v2211 = vmul.f32 %v2184, %v2184
      %v2212 = vmul.f32 %v2190, %v2190
      %v2213 = vmul.f32 %v2194, %v2194
      %v2214 = vsel %vm895, %v2198, 0.0
      %2215 = vadd.xlane.f32.xlu0 %v2214
      %v2216 = vpop.xlane.xlu0 %2215
      %v2217 = vsel %vm895, %v2199, 0.0
      %2218 = vadd.xlane.f32.xlu0 %v2217
      %v2219 = vpop.xlane.xlu0 %2218
      %v2220 = vsel %vm895, %v2200, 0.0
      %2221 = vadd.xlane.f32.xlu0 %v2220
      %v2222 = vpop.xlane.xlu0 %2221
      %v2223 = vsel %vm895, %v2201, 0.0
      %2224 = vadd.xlane.f32.xlu0 %v2223
      %v2225 = vpop.xlane.xlu0 %2224
      %v2226 = vsel %vm895, %v2202, 0.0
      %2227 = vadd.xlane.f32.xlu0 %v2226
      %v2228 = vpop.xlane.xlu0 %2227
      %v2229 = vsel %vm895, %v2203, 0.0
      %2230 = vadd.xlane.f32.xlu0 %v2229
      %v2231 = vpop.xlane.xlu0 %2230
      %v2232 = vsel %vm895, %v2204, 0.0
      %2233 = vadd.xlane.f32.xlu0 %v2232
      %v2234 = vpop.xlane.xlu0 %2233
      %v2235 = vsel %vm895, %v2205, 0.0
      %2236 = vadd.xlane.f32.xlu0 %v2235
      %v2237 = vpop.xlane.xlu0 %2236
      %v2238 = vsel %vm895, %v2206, 0.0
      %2239 = vadd.xlane.f32.xlu0 %v2238
      %v2240 = vpop.xlane.xlu0 %2239
      %v2241 = vsel %vm895, %v2207, 0.0
      %2242 = vadd.xlane.f32.xlu0 %v2241
      %v2243 = vpop.xlane.xlu0 %2242
      %v2244 = vsel %vm895, %v2208, 0.0
      %2245 = vadd.xlane.f32.xlu0 %v2244
      %v2246 = vpop.xlane.xlu0 %2245
      %v2247 = vsel %vm895, %v2209, 0.0
      %2248 = vadd.xlane.f32.xlu0 %v2247
      %v2249 = vpop.xlane.xlu0 %2248
      %v2250 = vsel %vm895, %v2210, 0.0
      %2251 = vadd.xlane.f32.xlu0 %v2250
      %v2252 = vpop.xlane.xlu0 %2251
      %v2253 = vsel %vm895, %v2211, 0.0
      %2254 = vadd.xlane.f32.xlu0 %v2253
      %v2255 = vpop.xlane.xlu0 %2254
      %v2256 = vsel %vm895, %v2212, 0.0
      %2257 = vadd.xlane.f32.xlu0 %v2256
      %v2258 = vpop.xlane.xlu0 %2257
      %v2259 = vsel %vm895, %v2213, 0.0
      %2260 = vadd.xlane.f32.xlu0 %v2259
      %v2261 = vpop.xlane.xlu0 %2260
      %v2262 = vsub.f32 %v548, %v2122
      %v2263 = vsub.f32 %v549, %v2126
      %v2264 = vsub.f32 %v550, %v2132
      %v2265 = vsub.f32 %v551, %v2136
      %v2266 = vsub.f32 %v552, %v2142
      %v2267 = vsub.f32 %v553, %v2146
      %v2268 = vsub.f32 %v554, %v2152
      %v2269 = vsub.f32 %v555, %v2156
      %v2270 = vsub.f32 %v556, %v2162
      %v2271 = vsub.f32 %v557, %v2166
      %v2272 = vsub.f32 %v558, %v2172
      %v2273 = vsub.f32 %v559, %v2176
      %v2274 = vsub.f32 %v560, %v2182
      %v2275 = vsub.f32 %v561, %v2186
      %v2276 = vsub.f32 %v562, %v2192
      %v2277 = vsub.f32 %v563, %v2196
      %v2278 = vmul.f32 %v2262, %v2120
      %v2279 = vmul.f32 %v2263, %v2124
      %v2280 = vmul.f32 %v2264, %v2130
      %v2281 = vmul.f32 %v2265, %v2134
      %v2282 = vmul.f32 %v2266, %v2140
      %v2283 = vmul.f32 %v2267, %v2144
      %v2284 = vmul.f32 %v2268, %v2150
      %v2285 = vmul.f32 %v2269, %v2154
      %v2286 = vmul.f32 %v2270, %v2160
      %v2287 = vmul.f32 %v2271, %v2164
      %v2288 = vmul.f32 %v2272, %v2170
      %v2289 = vmul.f32 %v2273, %v2174
      %v2290 = vmul.f32 %v2274, %v2180
      %v2291 = vmul.f32 %v2275, %v2184
      %v2292 = vmul.f32 %v2276, %v2190
      %v2293 = vmul.f32 %v2277, %v2194
      %v2294 = vsel %vm895, %v2278, 0.0
      %2295 = vadd.xlane.f32.xlu0 %v2294
      %v2296 = vpop.xlane.xlu0 %2295
      %v2297 = vsel %vm895, %v2279, 0.0
      %2298 = vadd.xlane.f32.xlu0 %v2297
      %v2299 = vpop.xlane.xlu0 %2298
      %v2300 = vsel %vm895, %v2280, 0.0
      %2301 = vadd.xlane.f32.xlu0 %v2300
      %v2302 = vpop.xlane.xlu0 %2301
      %v2303 = vsel %vm895, %v2281, 0.0
      %2304 = vadd.xlane.f32.xlu0 %v2303
      %v2305 = vpop.xlane.xlu0 %2304
      %v2306 = vsel %vm895, %v2282, 0.0
      %2307 = vadd.xlane.f32.xlu0 %v2306
      %v2308 = vpop.xlane.xlu0 %2307
      %v2309 = vsel %vm895, %v2283, 0.0
      %2310 = vadd.xlane.f32.xlu0 %v2309
      %v2311 = vpop.xlane.xlu0 %2310
      %v2312 = vsel %vm895, %v2284, 0.0
      %2313 = vadd.xlane.f32.xlu0 %v2312
      %v2314 = vpop.xlane.xlu0 %2313
      %v2315 = vsel %vm895, %v2285, 0.0
      %2316 = vadd.xlane.f32.xlu0 %v2315
      %v2317 = vpop.xlane.xlu0 %2316
      %v2318 = vsel %vm895, %v2286, 0.0
      %2319 = vadd.xlane.f32.xlu0 %v2318
      %v2320 = vpop.xlane.xlu0 %2319
      %v2321 = vsel %vm895, %v2287, 0.0
      %2322 = vadd.xlane.f32.xlu0 %v2321
      %v2323 = vpop.xlane.xlu0 %2322
      %v2324 = vsel %vm895, %v2288, 0.0
      %2325 = vadd.xlane.f32.xlu0 %v2324
      %v2326 = vpop.xlane.xlu0 %2325
      %v2327 = vsel %vm895, %v2289, 0.0
      %2328 = vadd.xlane.f32.xlu0 %v2327
      %v2329 = vpop.xlane.xlu0 %2328
      %v2330 = vsel %vm895, %v2290, 0.0
      %2331 = vadd.xlane.f32.xlu0 %v2330
      %v2332 = vpop.xlane.xlu0 %2331
      %v2333 = vsel %vm895, %v2291, 0.0
      %2334 = vadd.xlane.f32.xlu0 %v2333
      %v2335 = vpop.xlane.xlu0 %2334
      %v2336 = vsel %vm895, %v2292, 0.0
      %2337 = vadd.xlane.f32.xlu0 %v2336
      %v2338 = vpop.xlane.xlu0 %2337
      %v2339 = vsel %vm895, %v2293, 0.0
      %2340 = vadd.xlane.f32.xlu0 %v2339
      %v2341 = vpop.xlane.xlu0 %2340
      %v2342 = vrcp.pop %v2216
      %v2343 = vrcp.pop %v2219
      %v2344 = vrcp.pop %v2222
      %v2345 = vrcp.pop %v2225
      %v2346 = vrcp.pop %v2228
      %v2347 = vrcp.pop %v2231
      %v2348 = vrcp.pop %v2234
      %v2349 = vrcp.pop %v2237
      %v2350 = vrcp.pop %v2240
      %v2351 = vrcp.pop %v2243
      %v2352 = vrcp.pop %v2246
      %v2353 = vrcp.pop %v2249
      %v2354 = vrcp.pop %v2252
      %v2355 = vrcp.pop %v2255
      %v2356 = vrcp.pop %v2258
      %v2357 = vrcp.pop %v2261
      %v2358 = vmul.f32 %v2216, %v2342
      %v2359 = vmul.f32 %v2219, %v2343
      %v2360 = vmul.f32 %v2222, %v2344
      %v2361 = vmul.f32 %v2225, %v2345
      %v2362 = vmul.f32 %v2228, %v2346
      %v2363 = vmul.f32 %v2231, %v2347
      %v2364 = vmul.f32 %v2234, %v2348
      %v2365 = vmul.f32 %v2237, %v2349
      %v2366 = vmul.f32 %v2240, %v2350
      %v2367 = vmul.f32 %v2243, %v2351
      %v2368 = vmul.f32 %v2246, %v2352
      %v2369 = vmul.f32 %v2249, %v2353
      %v2370 = vmul.f32 %v2252, %v2354
      %v2371 = vmul.f32 %v2255, %v2355
      %v2372 = vmul.f32 %v2258, %v2356
      %v2373 = vmul.f32 %v2261, %v2357
      %v2374 = vsub.f32 2.0, %v2358
      %v2375 = vsub.f32 2.0, %v2359
      %v2376 = vsub.f32 2.0, %v2360
      %v2377 = vsub.f32 2.0, %v2361
      %v2378 = vsub.f32 2.0, %v2362
      %v2379 = vsub.f32 2.0, %v2363
      %v2380 = vsub.f32 2.0, %v2364
      %v2381 = vsub.f32 2.0, %v2365
      %v2382 = vsub.f32 2.0, %v2366
      %v2383 = vsub.f32 2.0, %v2367
      %v2384 = vsub.f32 2.0, %v2368
      %v2385 = vsub.f32 2.0, %v2369
      %v2386 = vsub.f32 2.0, %v2370
      %v2387 = vsub.f32 2.0, %v2371
      %v2388 = vsub.f32 2.0, %v2372
      %v2389 = vsub.f32 2.0, %v2373
      %v2390 = vmul.f32 %v2342, %v2374
      %v2391 = vmul.f32 %v2343, %v2375
      %v2392 = vmul.f32 %v2344, %v2376
      %v2393 = vmul.f32 %v2345, %v2377
      %v2394 = vmul.f32 %v2346, %v2378
      %v2395 = vmul.f32 %v2347, %v2379
      %v2396 = vmul.f32 %v2348, %v2380
      %v2397 = vmul.f32 %v2349, %v2381
      %v2398 = vmul.f32 %v2350, %v2382
      %v2399 = vmul.f32 %v2351, %v2383
      %v2400 = vmul.f32 %v2352, %v2384
      %v2401 = vmul.f32 %v2353, %v2385
      %v2402 = vmul.f32 %v2354, %v2386
      %v2403 = vmul.f32 %v2355, %v2387
      %v2404 = vmul.f32 %v2356, %v2388
      %v2405 = vmul.f32 %v2357, %v2389
      %v2406 = vmul.f32 %v2296, %v2390
      %v2407 = vmul.f32 %v2299, %v2391
      %v2408 = vmul.f32 %v2302, %v2392
      %v2409 = vmul.f32 %v2305, %v2393
      %v2410 = vmul.f32 %v2308, %v2394
      %v2411 = vmul.f32 %v2311, %v2395
      %v2412 = vmul.f32 %v2314, %v2396
      %v2413 = vmul.f32 %v2317, %v2397
      %v2414 = vmul.f32 %v2320, %v2398
      %v2415 = vmul.f32 %v2323, %v2399
      %v2416 = vmul.f32 %v2326, %v2400
      %v2417 = vmul.f32 %v2329, %v2401
      %v2418 = vmul.f32 %v2332, %v2402
      %v2419 = vmul.f32 %v2335, %v2403
      %v2420 = vmul.f32 %v2338, %v2404
      %v2421 = vmul.f32 %v2341, %v2405
      %v2422 = vmul.f32 %v2406, 2.0
      %v2423 = vmul.f32 %v2407, 2.0
      %v2424 = vmul.f32 %v2408, 2.0
      %v2425 = vmul.f32 %v2409, 2.0
      %v2426 = vmul.f32 %v2410, 2.0
      %v2427 = vmul.f32 %v2411, 2.0
      %v2428 = vmul.f32 %v2412, 2.0
      %v2429 = vmul.f32 %v2413, 2.0
      %v2430 = vmul.f32 %v2414, 2.0
      %v2431 = vmul.f32 %v2415, 2.0
      %v2432 = vmul.f32 %v2416, 2.0
      %v2433 = vmul.f32 %v2417, 2.0
      %v2434 = vmul.f32 %v2418, 2.0
      %v2435 = vmul.f32 %v2419, 2.0
      %v2436 = vmul.f32 %v2420, 2.0
      %v2437 = vmul.f32 %v2421, 2.0
      %v2438 = vmul.f32 %v2422, %v2120
      %v2439 = vmul.f32 %v2423, %v2124
      %v2440 = vmul.f32 %v2424, %v2130
      %v2441 = vmul.f32 %v2425, %v2134
      %v2442 = vmul.f32 %v2426, %v2140
      %v2443 = vmul.f32 %v2427, %v2144
      %v2444 = vmul.f32 %v2428, %v2150
      %v2445 = vmul.f32 %v2429, %v2154
      %v2446 = vmul.f32 %v2430, %v2160
      %v2447 = vmul.f32 %v2431, %v2164
      %v2448 = vmul.f32 %v2432, %v2170
      %v2449 = vmul.f32 %v2433, %v2174
      %v2450 = vmul.f32 %v2434, %v2180
      %v2451 = vmul.f32 %v2435, %v2184
      %v2452 = vmul.f32 %v2436, %v2190
      %v2453 = vmul.f32 %v2437, %v2194
      %v2454 = vsub.f32 %v548, %v2438
      %v2455 = vsub.f32 %v549, %v2439
      %v2456 = vsub.f32 %v550, %v2440
      %v2457 = vsub.f32 %v551, %v2441
      %v2458 = vsub.f32 %v552, %v2442
      %v2459 = vsub.f32 %v553, %v2443
      %v2460 = vsub.f32 %v554, %v2444
      %v2461 = vsub.f32 %v555, %v2445
      %v2462 = vsub.f32 %v556, %v2446
      %v2463 = vsub.f32 %v557, %v2447
      %v2464 = vsub.f32 %v558, %v2448
      %v2465 = vsub.f32 %v559, %v2449
      %v2466 = vsub.f32 %v560, %v2450
      %v2467 = vsub.f32 %v561, %v2451
      %v2468 = vsub.f32 %v562, %v2452
      %v2469 = vsub.f32 %v563, %v2453
      %2470 = vst.msk [vmem:[%s545] sm:$0xff] %vm895, %v2454
      %2471 = vst.msk [vmem:[%s545 + $0x8] sm:$0xff] %vm895, %v2455
      %2472 = vst.msk [vmem:[%s545 + $0x10] sm:$0xff] %vm895, %v2456
      %2473 = vst.msk [vmem:[%s545 + $0x18] sm:$0xff] %vm895, %v2457
      %2474 = vst.msk [vmem:[%s545 + $0x20] sm:$0xff] %vm895, %v2458
      %2475 = vst.msk [vmem:[%s545 + $0x28] sm:$0xff] %vm895, %v2459
      %2476 = vst.msk [vmem:[%s545 + $0x30] sm:$0xff] %vm895, %v2460
      %2477 = vst.msk [vmem:[%s545 + $0x38] sm:$0xff] %vm895, %v2461
      %2478 = vst.msk [vmem:[%s545 + $0x40] sm:$0xff] %vm895, %v2462
      %2479 = vst.msk [vmem:[%s545 + $0x48] sm:$0xff] %vm895, %v2463
      %2480 = vst.msk [vmem:[%s545 + $0x50] sm:$0xff] %vm895, %v2464
      %2481 = vst.msk [vmem:[%s545 + $0x58] sm:$0xff] %vm895, %v2465
      %2482 = vst.msk [vmem:[%s545 + $0x60] sm:$0xff] %vm895, %v2466
      %2483 = vst.msk [vmem:[%s545 + $0x68] sm:$0xff] %vm895, %v2467
      %2484 = vst.msk [vmem:[%s545 + $0x70] sm:$0xff] %vm895, %v2468
      %2485 = vst.msk [vmem:[%s545 + $0x78] sm:$0xff] %vm895, %v2469
      %s2486 = smul.u32 16, %s27
      %p2487 = scmp.lt.s32.totalorder %s2486, 31
      %s2488 = scalar_select %p2487, %s2486, 31
      %s2489 = smul.addr %s2488, 8
      %s2490 = scalar_lea.vmem %s16, %s2489
      // Predicated region
      $region85: #{tpu_custom_call.1} parent=83 // pred_check
        %p2491 = pneg %p391
      $region86: #{tpu_custom_call.1} parent=83 // pred_check_branch
        %2493 = sbr.rel (%p2491) target = $region88
      $region87: #{tpu_custom_call.1} parent=83 // pred_region
        %s2494 = smul.u32 16, %s27
      $region88: #{tpu_custom_call.1} parent=83 // pred_fallthru
        _
    $region84: #{tpu_custom_call.1} parent=5 // pred_fallthru
      _
    %p2495 = scmp.le.s32.totalorder 2, %s22
    // Predicated region
    $region89: #{tpu_custom_call.1} parent=5 // pred_check
      %p2496 = pneg %p2495
    $region90: #{tpu_custom_call.1} parent=5 // pred_check_branch
      %2498 = sbr.rel (%p2496) target = $region92
    $region91: #{tpu_custom_call.1} parent=5 // pred_region
      %s2499 = ssub.s32 %s22, 2
      // Predicated region
      $region93: #{tpu_custom_call.1} parent=91 // pred_check
        %p2500 = pneg %p397
      $region94: #{tpu_custom_call.1} parent=91 // pred_check_branch
        %2502 = sbr.rel (%p2500) target = $region96
      $region95: #{tpu_custom_call.1} parent=91 // pred_region
        %s2503 = smul.u32 16, %s28
        %p2504 = scmp.lt.s32.totalorder %s2503, 31
        %s2505 = scalar_select %p2504, %s2503, 31
        %s2506 = smul.addr %s2505, 8
        %s2507 = scalar_lea.vmem %s16, %s2506
      $region96: #{tpu_custom_call.1} parent=91 // pred_fallthru
        _
    $region92: #{tpu_custom_call.1} parent=5 // pred_fallthru
      _
  $region6: #{tpu_custom_call.1} parent=0 // loop_footer
    %s26 = sadd.s32 1, %s22
  $region7: #{tpu_custom_call.1} parent=0 // loop_footer_branch
    %21 = sbr.rel target = $region3
  $region8: #{tpu_custom_call.1} parent=0 // loop_exit
    _

</llo_original>
